<compile_context>
chip_gen: v7x
topology: tpu7x:2x2x1
jax: 0.10.0
libtpu: 0.0.40
codegen_flags: <defaults>
</compile_context>

<pallas_src>
import functools

import jax
import jax.numpy as jnp
from jax.experimental import pallas as pl
from jax.experimental.pallas import tpu as pltpu

_VMEM_LIMIT = 32 * 1024 * 1024  # safe on v5e/v6e (128 MiB) and v7x (64 MiB)


# ---------------------------------------------------------------------------
# Kernel 1: fused pointwise linear + residual add + ReLU (channel-first).
#   x  : (I, TS)  spatial tile of the input, channels on sublanes
#   xs : (O, TS)  spatial tile of the spectral branch (irfft2 output)
#   w  : (O, I)   linear weight;  b : (O, 1) bias
#   out: (O, TS) = relu(w @ x + b + xs)        <- lane-dense output stores
# ---------------------------------------------------------------------------
def _linear_add_relu_kernel(x_ref, xs_ref, w_ref, b_ref, o_ref):
    lin = jnp.dot(w_ref[...], x_ref[...], preferred_element_type=jnp.float32)
    o_ref[...] = jnp.maximum(lin + b_ref[...] + xs_ref[...], 0.0).astype(o_ref.dtype)


def fused_linear_add_relu(x_cf, xs_cf, w, bias):
    """x_cf: (B, I, S), xs_cf: (B, O, S), w: (O, I), bias: (O,) -> (B, O, S)."""
    B, I, S = x_cf.shape
    O = xs_cf.shape[1]

    # Pad the spatial (lane) axis to a multiple of 128 so stores are unmasked
    # and the last tile is never a whole-array fallback block.
    s_pad = ((S + 127) // 128) * 128
    if s_pad != S:
        pad = ((0, 0), (0, 0), (0, s_pad - S))
        x_cf = jnp.pad(x_cf, pad)
        xs_cf = jnp.pad(xs_cf, pad)

    ts = 128
    for cand in (2048, 1024, 512, 256):
        if s_pad % cand == 0:
            ts = cand
            break

    out = pl.pallas_call(
        _linear_add_relu_kernel,
        out_shape=jax.ShapeDtypeStruct((B, O, s_pad), jnp.float32),
        grid=(B, s_pad // ts),
        in_specs=[
            pl.BlockSpec((None, I, ts), lambda b, s: (b, 0, s)),
            pl.BlockSpec((None, O, ts), lambda b, s: (b, 0, s)),
            pl.BlockSpec((O, I), lambda b, s: (0, 0)),
            pl.BlockSpec((O, 1), lambda b, s: (0, 0)),
        ],
        out_specs=pl.BlockSpec((None, O, ts), lambda b, s: (b, 0, s)),
        compiler_params=pltpu.CompilerParams(
            dimension_semantics=("parallel", "parallel"),
            vmem_limit_bytes=_VMEM_LIMIT),
    )(x_cf, xs_cf, w, bias.reshape(O, 1))
    return out[:, :, :S]


# ---------------------------------------------------------------------------
# Kernel 2: complex mode mixing as a batched matmul over modes.
#   Both retained mode blocks (low / high rows) are folded into one leading
#   axis of SK = 2 * n_modes^2 modes.  Per mode k:
#     a_pk[k] : (B, 2I)  = [Re(x_ft) | Im(x_ft)]
#     w_pk[k] : (2I, 2O) = [[wr, wi], [-wi, wr]]
#     out[k]  : (B, 2O)  = a_pk[k] @ w_pk[k] = [Re(out_ft) | Im(out_ft)]
#   MXU contraction over 2I, no broadcast materialization, no XLU reduce.
# ---------------------------------------------------------------------------
def _cmix_kernel(a_ref, w_ref, o_ref):
    o_ref[...] = jnp.einsum(
        "kbi,kio->kbo", a_ref[...], w_ref[...],
        preferred_element_type=jnp.float32).astype(o_ref.dtype)


def complex_mode_mix(a_pk, w_pk, *, max_block_bytes=2 * 1024 * 1024):
    SK, B, I2 = a_pk.shape
    O2 = w_pk.shape[-1]
    per_mode_bytes = (I2 * O2 + B * I2 + B * O2) * 4
    tk = 1
    for cand in (2, 4, 8, 16, 32, 64, 128):
        if SK % cand == 0 and cand * per_mode_bytes <= max_block_bytes:
            tk = cand
    return pl.pallas_call(
        _cmix_kernel,
        out_shape=jax.ShapeDtypeStruct((SK, B, O2), jnp.float32),
        grid=(SK // tk,),
        in_specs=[
            pl.BlockSpec((tk, B, I2), lambda k: (k, 0, 0)),
            pl.BlockSpec((tk, I2, O2), lambda k: (k, 0, 0)),
        ],
        out_specs=pl.BlockSpec((tk, B, O2), lambda k: (k, 0, 0)),
        compiler_params=pltpu.CompilerParams(
            dimension_semantics=("parallel",),
            vmem_limit_bytes=_VMEM_LIMIT),
    )(a_pk, w_pk)


# ---------------------------------------------------------------------------
# SpectralConv2d forward (Pallas kernels + jnp FFT glue)
# ---------------------------------------------------------------------------
def spectral_conv2d_forward(x, lin_w, lin_b, fourier_w0, fourier_w1, n_modes,
                            residual=True):
    """x: (B, M, N, I) float32. lin_w: (O, I), lin_b: (O,).
    fourier_w{0,1}: (I, O, n_modes, n_modes, 2)."""
    B, M, N, I = x.shape
    O = lin_w.shape[0]
    assert M == N, "module's internal out_ft shape quirk requires M == N"
    assert I == O, "module writes O-channel modes into an I-channel buffer"
    nm = n_modes
    S = M * N

    # Channel-first internal layout: FFT over the last two axes and a large
    # lane-dense spatial axis for the fused pointwise kernel.
    x_cf = jnp.transpose(x, (0, 3, 1, 2))                       # (B, I, M, N)
    x_ft = jnp.fft.rfft2(x_cf, s=(M, N), norm="ortho")          # (B, I, M, N//2+1)

    # ---- pack retained modes for the batched mode-mix matmul --------------
    K = nm * nm
    SK = 2 * K
    a = jnp.stack([x_ft[:, :, :nm, :nm], x_ft[:, :, -nm:, :nm]], axis=0)
    ar = jnp.real(a).astype(jnp.float32)                        # (2, B, I, nm, nm)
    ai = jnp.imag(a).astype(jnp.float32)
    ar_k = jnp.transpose(ar, (0, 3, 4, 1, 2)).reshape(SK, B, I)
    ai_k = jnp.transpose(ai, (0, 3, 4, 1, 2)).reshape(SK, B, I)
    a_pk = jnp.concatenate([ar_k, ai_k], axis=-1)               # (SK, B, 2I)

    w = jnp.stack([fourier_w0, fourier_w1], axis=0)             # (2, I, O, nm, nm, 2)
    wr_k = jnp.transpose(w[..., 0], (0, 3, 4, 1, 2)).reshape(SK, I, O)
    wi_k = jnp.transpose(w[..., 1], (0, 3, 4, 1, 2)).reshape(SK, I, O)
    w_pk = jnp.concatenate(
        [jnp.concatenate([wr_k, wi_k], axis=-1),
         jnp.concatenate([-wi_k, wr_k], axis=-1)], axis=1)      # (SK, 2I, 2O)

    out_pk = complex_mode_mix(a_pk, w_pk)                       # (SK, B, 2O)
    o_r = jnp.transpose(out_pk[..., :O].reshape(2, nm, nm, B, O), (0, 3, 4, 1, 2))
    o_i = jnp.transpose(out_pk[..., O:].reshape(2, nm, nm, B, O), (0, 3, 4, 1, 2))
    o_c = (o_r + 1j * o_i).astype(jnp.complex64)                # (2, B, O, nm, nm)

    out_ft = jnp.zeros((B, O, N, M // 2 + 1), dtype=jnp.complex64)
    out_ft = out_ft.at[:, :, :nm, :nm].set(o_c[0])
    out_ft = out_ft.at[:, :, -nm:, :nm].set(o_c[1])

    xs_cf = jnp.fft.irfft2(out_ft, s=(N, M), norm="ortho")      # (B, O, N, M)

    if not residual:
        return jnp.transpose(xs_cf, (0, 2, 3, 1)).astype(jnp.float32)

    out_cf = fused_linear_add_relu(
        x_cf.reshape(B, I, S).astype(jnp.float32),
        xs_cf.reshape(B, O, S).astype(jnp.float32),
        lin_w.astype(jnp.float32), lin_b.astype(jnp.float32))   # (B, O, S)
    return jnp.transpose(out_cf.reshape(B, O, M, N), (0, 2, 3, 1))


# ---------------------------------------------------------------------------
# Pure-JAX reference (mirrors the PyTorch module)
# ---------------------------------------------------------------------------
def spectral_conv2d_reference(x, lin_w, lin_b, fourier_w0, fourier_w1, n_modes):
    B, M, N, I = x.shape
    O = lin_w.shape[0]
    nm = n_modes
    res = x @ lin_w.T + lin_b
    xt = jnp.transpose(x, (0, 3, 1, 2))
    x_ft = jnp.fft.rfft2(xt, s=(M, N), norm="ortho")

    def cmul(a, w):
        wr, wi = w[..., 0], w[..., 1]
        rr = jnp.einsum("bixy,ioxy->boxy", a.real, wr)
        ii = jnp.einsum("bixy,ioxy->boxy", a.imag, wi)
        ri = jnp.einsum("bixy,ioxy->boxy", a.imag, wr)
        ir = jnp.einsum("bixy,ioxy->boxy", a.real, wi)
        return (rr - ii) + 1j * (ri + ir)

    out_ft = jnp.zeros((B, O, N, M // 2 + 1), dtype=jnp.complex64)
    out_ft = out_ft.at[:, :, :nm, :nm].set(cmul(x_ft[:, :, :nm, :nm], fourier_w0))
    out_ft = out_ft.at[:, :, -nm:, :nm].set(cmul(x_ft[:, :, -nm:, :nm], fourier_w1))
    xs = jnp.fft.irfft2(out_ft, s=(N, M), norm="ortho")
    xs = jnp.transpose(xs, (0, 2, 3, 1))
    return jax.nn.relu(xs + res)


# ---------------------------------------------------------------------------
if __name__ == "__main__":
    B, M, N = 2, 16, 16
    in_dim = out_dim = 4
    n_modes = 6

    key = jax.random.PRNGKey(0)
    k_x, k_w, k_b, k_f0, k_f1 = jax.random.split(key, 5)

    x = jax.random.normal(k_x, (B, M, N, in_dim), dtype=jnp.float32)

    # nn.Linear(in_dim, out_dim) params (deterministic synthetic init)
    lin_w = jax.random.normal(k_w, (out_dim, in_dim), dtype=jnp.float32) * 0.1
    lin_b = jax.random.normal(k_b, (out_dim,), dtype=jnp.float32) * 0.1

    # fourier_weight: xavier_normal_ with gain = 1/(in_dim*out_dim)
    fan_in = out_dim * n_modes * n_modes * 2
    fan_out = in_dim * n_modes * n_modes * 2
    std = (1.0 / (in_dim * out_dim)) * (2.0 / (fan_in + fan_out)) ** 0.5
    fshape = (in_dim, out_dim, n_modes, n_modes, 2)
    fourier_w0 = jax.random.normal(k_f0, fshape, dtype=jnp.float32) * std
    fourier_w1 = jax.random.normal(k_f1, fshape, dtype=jnp.float32) * std

    fwd = jax.jit(functools.partial(spectral_conv2d_forward, n_modes=n_modes))
    out = fwd(x, lin_w, lin_b, fourier_w0, fourier_w1)
    out = jax.block_until_ready(out)

    ref = spectral_conv2d_reference(x, lin_w, lin_b, fourier_w0, fourier_w1,
                                    n_modes)
    assert out.shape == (B, M, N, out_dim)
    assert jnp.allclose(out, ref, atol=1e-4, rtol=1e-4), (
        float(jnp.max(jnp.abs(out - ref))))

    print("KERNEL_OK")
</pallas_src>

<mosaic_0001>
module attributes {stable_mosaic.version = 11 : i64} {
  func.func @_cmix_kernel(%arg0: i32, %arg1: memref<8x2x8xf32, #tpu.memory_space<vmem>>, %arg2: memref<8x8x8xf32, #tpu.memory_space<vmem>>, %arg3: memref<8x2x8xf32, #tpu.memory_space<vmem>>) attributes {dimension_semantics = [#tpu.dimension_semantics<parallel>], iteration_bounds = array<i64: 9>, scalar_prefetch = 0 : i64, scratch_operands = 0 : i64, tpu.core_type = #tpu.core_type<tc>, window_params = [{transform_indices = @transform_0, window_bounds = array<i64: 8, 2, 8>}, {transform_indices = @transform_1, window_bounds = array<i64: 8, 8, 8>}, {transform_indices = @transform_2, window_bounds = array<i64: 8, 2, 8>}]} {
    %c0 = arith.constant 0 : index
    %c0_0 = arith.constant 0 : index
    %c0_1 = arith.constant 0 : index
    %0 = vector.load %arg1[%c0, %c0_0, %c0_1] : memref<8x2x8xf32, #tpu.memory_space<vmem>>, vector<8x2x8xf32>
    %c0_2 = arith.constant 0 : index
    %c0_3 = arith.constant 0 : index
    %c0_4 = arith.constant 0 : index
    %1 = vector.load %arg2[%c0_2, %c0_3, %c0_4] : memref<8x8x8xf32, #tpu.memory_space<vmem>>, vector<8x8x8xf32>
    "tpu.trace_start"() <{level = 10 : i32, message = "kbi,kio->kbo"}> : () -> ()
    %cst = arith.constant dense<0.000000e+00> : vector<8x2x8xf32>
    %2 = tpu.matmul %0, %1, %cst {dimension_numbers = #tpu.dot_dimension_numbers<[2], [1], [1], [2], [0, 0, 0, 1, 1, 2], [0], [0]>} : vector<8x2x8xf32>, vector<8x8x8xf32>, vector<8x2x8xf32> -> vector<8x2x8xf32>
    "tpu.trace_stop"() : () -> ()
    %c0_5 = arith.constant 0 : index
    %c0_6 = arith.constant 0 : index
    %c0_7 = arith.constant 0 : index
    %3 = vector.load %arg3[%c0_5, %c0_6, %c0_7] : memref<8x2x8xf32, #tpu.memory_space<vmem>>, vector<8x2x8xf32>
    tpu.vector_store %arg3[%c0_5, %c0_6, %c0_7], %2 {strides = array<i32>} : memref<8x2x8xf32, #tpu.memory_space<vmem>>, vector<8x2x8xf32>,
    return
  }
  func.func @transform_0(%arg0: i32) -> (i32, i32, i32) {
    %c0_i32 = arith.constant 0 : i32
    %c0_i32_0 = arith.constant 0 : i32
    %c0_i32_1 = arith.constant 0 : i32
    return %arg0, %c0_i32, %c0_i32_0 : i32, i32, i32
  }
  func.func @transform_1(%arg0: i32) -> (i32, i32, i32) {
    %c0_i32 = arith.constant 0 : i32
    %c0_i32_0 = arith.constant 0 : i32
    %c0_i32_1 = arith.constant 0 : i32
    return %arg0, %c0_i32, %c0_i32_0 : i32, i32, i32
  }
  func.func @transform_2(%arg0: i32) -> (i32, i32, i32) {
    %c0_i32 = arith.constant 0 : i32
    %c0_i32_0 = arith.constant 0 : i32
    %c0_i32_1 = arith.constant 0 : i32
    return %arg0, %c0_i32, %c0_i32_0 : i32, i32, i32
  }
}

module attributes {stable_mosaic.version = 11 : i64} {
  func.func @_linear_add_relu_kernel(%arg0: i32, %arg1: i32, %arg2: memref<1x4x256xf32, #tpu.memory_space<vmem>>, %arg3: memref<1x4x256xf32, #tpu.memory_space<vmem>>, %arg4: memref<4x4xf32, #tpu.memory_space<vmem>>, %arg5: memref<4x1xf32, #tpu.memory_space<vmem>>, %arg6: memref<1x4x256xf32, #tpu.memory_space<vmem>>) attributes {dimension_semantics = [#tpu.dimension_semantics<parallel>, #tpu.dimension_semantics<parallel>], iteration_bounds = array<i64: 2, 1>, scalar_prefetch = 0 : i64, scratch_operands = 0 : i64, tpu.core_type = #tpu.core_type<tc>, window_params = [{transform_indices = @transform_0, window_bounds = array<i64: 1, 4, 256>}, {transform_indices = @transform_1, window_bounds = array<i64: 1, 4, 256>}, {pipeline_mode = #tpu.pipeline_mode<synchronous>, transform_indices = @transform_2, window_bounds = array<i64: 4, 4>}, {pipeline_mode = #tpu.pipeline_mode<synchronous>, transform_indices = @transform_3, window_bounds = array<i64: 4, 1>}, {transform_indices = @transform_4, window_bounds = array<i64: 1, 4, 256>}]} {
    %c0 = arith.constant 0 : index
    %c0_0 = arith.constant 0 : index
    %0 = vector.load %arg4[%c0, %c0_0] : memref<4x4xf32, #tpu.memory_space<vmem>>, vector<4x4xf32>
    %c0_1 = arith.constant 0 : index
    %c0_2 = arith.constant 0 : index
    %c0_3 = arith.constant 0 : index
    %1 = vector.load %arg2[%c0_1, %c0_2, %c0_3] : memref<1x4x256xf32, #tpu.memory_space<vmem>>, vector<1x4x256xf32>
    %2 = vector.shape_cast %1 : vector<1x4x256xf32> to vector<4x256xf32>
    %cst = arith.constant dense<0.000000e+00> : vector<4x256xf32>
    %3 = tpu.matmul %0, %2, %cst {dimension_numbers = #tpu.dot_dimension_numbers<[1], [0], [0], [1], [0, 0, 1, 1], [], []>} : vector<4x4xf32>, vector<4x256xf32>, vector<4x256xf32> -> vector<4x256xf32>
    %c0_4 = arith.constant 0 : index
    %c0_5 = arith.constant 0 : index
    %4 = vector.load %arg5[%c0_4, %c0_5] : memref<4x1xf32, #tpu.memory_space<vmem>>, vector<4x1xf32>
    %5 = vector.broadcast %4 : vector<4x1xf32> to vector<4x256xf32>
    %6 = arith.addf %3, %5 : vector<4x256xf32>
    %c0_6 = arith.constant 0 : index
    %c0_7 = arith.constant 0 : index
    %c0_8 = arith.constant 0 : index
    %7 = vector.load %arg3[%c0_6, %c0_7, %c0_8] : memref<1x4x256xf32, #tpu.memory_space<vmem>>, vector<1x4x256xf32>
    %8 = vector.shape_cast %7 : vector<1x4x256xf32> to vector<4x256xf32>
    %9 = arith.addf %6, %8 : vector<4x256xf32>
    %cst_9 = arith.constant 0.000000e+00 : f32
    %10 = vector.broadcast %cst_9 : f32 to vector<4x256xf32>
    %11 = arith.maximumf %9, %10 : vector<4x256xf32>
    %c0_10 = arith.constant 0 : index
    %c0_11 = arith.constant 0 : index
    %c0_12 = arith.constant 0 : index
    %12 = vector.load %arg6[%c0_10, %c0_11, %c0_12] : memref<1x4x256xf32, #tpu.memory_space<vmem>>, vector<1x4x256xf32>
    %13 = vector.shape_cast %12 : vector<1x4x256xf32> to vector<4x256xf32>
    %14 = vector.shape_cast %11 : vector<4x256xf32> to vector<1x4x256xf32>
    tpu.vector_store %arg6[%c0_10, %c0_11, %c0_12], %14 {strides = array<i32>} : memref<1x4x256xf32, #tpu.memory_space<vmem>>, vector<1x4x256xf32>,
    return
  }
  func.func @transform_0(%arg0: i32, %arg1: i32) -> (i32, i32, i32) {
    %c0_i32 = arith.constant 0 : i32
    %c0_i32_0 = arith.constant 0 : i32
    return %arg0, %c0_i32, %arg1 : i32, i32, i32
  }
  func.func @transform_1(%arg0: i32, %arg1: i32) -> (i32, i32, i32) {
    %c0_i32 = arith.constant 0 : i32
    %c0_i32_0 = arith.constant 0 : i32
    return %arg0, %c0_i32, %arg1 : i32, i32, i32
  }
  func.func @transform_2(%arg0: i32, %arg1: i32) -> (i32, i32) {
    %c0_i32 = arith.constant 0 : i32
    %c0_i32_0 = arith.constant 0 : i32
    %c0_i32_1 = arith.constant 0 : i32
    return %c0_i32, %c0_i32_0 : i32, i32
  }
  func.func @transform_3(%arg0: i32, %arg1: i32) -> (i32, i32) {
    %c0_i32 = arith.constant 0 : i32
    %c0_i32_0 = arith.constant 0 : i32
    %c0_i32_1 = arith.constant 0 : i32
    return %c0_i32, %c0_i32_0 : i32, i32
  }
  func.func @transform_4(%arg0: i32, %arg1: i32) -> (i32, i32, i32) {
    %c0_i32 = arith.constant 0 : i32
    %c0_i32_0 = arith.constant 0 : i32
    return %arg0, %c0_i32, %arg1 : i32, i32, i32
  }
}

</mosaic_0001>

<llo_original>
// kernel: neg.1
$region0: #{neg.1}
  #allocation0 [shape = 's32[1]{0}', space=sflag, size = 0x4, scoped, tag = 'scoped memory for neg.1']
  %s0 = inlined_call_operand.vmem [shape: f32[72,4,4], index: 0, kind: input, shape index: {}]
  %s1 = inlined_call_operand.vmem [shape: f32[72,4,4], index: 1, kind: output, shape index: {}]
  %v2 = vld [vmem:[%s0] sm:$0xf]
  %3 = xla_tuple %v2
  %4 = xla_tuple %3
  %v5 = vxor.u32 %v2, 2147483648
  %6 = xla_tuple %v5
  %7 = vst [vmem:[%s1] sm:$0xf] %v5
  %s8 = scalar_lea.vmem %s0, 4
  %v9 = vld [vmem:[%s8] sm:$0xf]
  %10 = xla_tuple %v9
  %11 = xla_tuple %10
  %v12 = vxor.u32 %v9, 2147483648
  %13 = xla_tuple %v12
  %s14 = scalar_lea.vmem %s1, 4
  %15 = vst [vmem:[%s14] sm:$0xf] %v12
  %s16 = scalar_lea.vmem %s0, 8
  %v17 = vld [vmem:[%s16] sm:$0xf]
  %18 = xla_tuple %v17
  %19 = xla_tuple %18
  %v20 = vxor.u32 %v17, 2147483648
  %21 = xla_tuple %v20
  %s22 = scalar_lea.vmem %s1, 8
  %23 = vst [vmem:[%s22] sm:$0xf] %v20
  %s24 = scalar_lea.vmem %s0, 12
  %v25 = vld [vmem:[%s24] sm:$0xf]
  %26 = xla_tuple %v25
  %27 = xla_tuple %26
  %v28 = vxor.u32 %v25, 2147483648
  %29 = xla_tuple %v28
  %s30 = scalar_lea.vmem %s1, 12
  %31 = vst [vmem:[%s30] sm:$0xf] %v28

// kernel: spectral_conv2d_forward.2
$region0: #{spectral_conv2d_forward.2}
  #allocation0 [shape = 'u32[]', space=smem, size = 0x4, offset = 0x4, fixed_abs, tag = 'smem constant byte address 0x4 - core index']
  #allocation1 [shape = 'u32[144,128]{1,0:T(1,128)}', space=vmem, size = 0x12000, scoped, tag = 'internal scratch']
  %s0 = inlined_call_operand.vmem [shape: f32[72,2,8], index: 0, kind: input, shape index: {}]
  %s1 = inlined_call_operand.vmem [shape: f32[72,8,8], index: 1, kind: input, shape index: {}]
  %s2 = inlined_call_operand.vmem [shape: f32[72,2,8], index: 2, kind: output, shape index: {}]
  %s3 = sld [smem:[#allocation0]]
  $region41: #{spectral_conv2d_forward.2} parent=0
    _
  %s5 = ssub.s32 1, %s3
  %s6 = scalar_select 0, %s5, %s3
  loop: start=0, step=1, limit=11
  $region2: #{spectral_conv2d_forward.2} parent=0 // loop_pre_header
    _
  $region3: #{spectral_conv2d_forward.2} parent=0 // loop_header
    %s8 = sphi 0, %s12
    %p9 = scmp.ge.s32.totalorder %s8, 11
    %s18 = sphi 0, %s20
    %s21 = sphi 0, %s18
    %s22 = sphi 0, %s21
    %s38 = sphi 0, %s22
    %s44 = sphi 0, %s46
    %s47 = sphi 0, %s44
    %s48 = sphi 0, %s47
    %s64 = sphi 0, %s48
    %s70 = sphi 0, %s72
    %s73 = sphi 0, %s70
    %s74 = sphi 0, %s73
    %s90 = sphi 0, %s74
  $region4: #{spectral_conv2d_forward.2} parent=0 // loop_header_branch
    %11 = sbr.rel (%p9) target = $region8
  $region5: #{spectral_conv2d_forward.2} parent=0 // loop_body
    %s13 = ssub.s32 %s8, 1
    %s14 = ssub.s32 %s8, 2
    %s15 = sadd.s32 %s8, 1
    %s16 = ssub.s32 %s8, %s15
    %p17 = scmp.eq.s32.totalorder %s16, 0
    %s19 = sadd.s32 %s18, 1
    %s20 = scalar_select %p17, %s18, %s19
    %p23 = pneg %p17
    %p24 = scmp.eq.s32.totalorder %s8, 8
    %p25 = por %p23, %p24
    %p26 = scmp.ne.s32.totalorder %s18, %s21
    %p27 = scmp.eq.s32.totalorder %s8, 0
    %p28 = por %p26, %p27
    %p29 = scmp.ne.s32.totalorder %s18, %s21
    %p30 = scmp.eq.s32.totalorder %s13, 8
    %p31 = por %p29, %p30
    %p32 = scmp.ne.s32.totalorder %s21, %s22
    %p33 = scmp.eq.s32.totalorder %s13, 0
    %p34 = por %p32, %p33
    %p35 = scmp.ne.s32.totalorder %s21, %s22
    %p36 = scmp.eq.s32.totalorder %s14, 8
    %p37 = por %p35, %p36
    %p39 = scmp.ne.s32.totalorder %s22, %s38
    %p40 = scmp.eq.s32.totalorder %s14, 0
    %p41 = por %p39, %p40
    %s42 = ssub.s32 %s8, %s15
    %p43 = scmp.eq.s32.totalorder %s42, 0
    %s45 = sadd.s32 %s44, 1
    %s46 = scalar_select %p43, %s44, %s45
    %p49 = pneg %p43
    %p50 = scmp.eq.s32.totalorder %s8, 8
    %p51 = por %p49, %p50
    %p52 = scmp.ne.s32.totalorder %s44, %s47
    %p53 = scmp.eq.s32.totalorder %s8, 0
    %p54 = por %p52, %p53
    %p55 = scmp.ne.s32.totalorder %s44, %s47
    %p56 = scmp.eq.s32.totalorder %s13, 8
    %p57 = por %p55, %p56
    %p58 = scmp.ne.s32.totalorder %s47, %s48
    %p59 = scmp.eq.s32.totalorder %s13, 0
    %p60 = por %p58, %p59
    %p61 = scmp.ne.s32.totalorder %s47, %s48
    %p62 = scmp.eq.s32.totalorder %s14, 8
    %p63 = por %p61, %p62
    %p65 = scmp.ne.s32.totalorder %s48, %s64
    %p66 = scmp.eq.s32.totalorder %s14, 0
    %p67 = por %p65, %p66
    %s68 = ssub.s32 %s8, %s15
    %p69 = scmp.eq.s32.totalorder %s68, 0
    %s71 = sadd.s32 %s70, 1
    %s72 = scalar_select %p69, %s70, %s71
    %p75 = pneg %p69
    %p76 = scmp.eq.s32.totalorder %s8, 8
    %p77 = por %p75, %p76
    %p78 = scmp.ne.s32.totalorder %s70, %s73
    %p79 = scmp.eq.s32.totalorder %s8, 0
    %p80 = por %p78, %p79
    %p81 = scmp.ne.s32.totalorder %s70, %s73
    %p82 = scmp.eq.s32.totalorder %s13, 8
    %p83 = por %p81, %p82
    %p84 = scmp.ne.s32.totalorder %s73, %s74
    %p85 = scmp.eq.s32.totalorder %s13, 0
    %p86 = por %p84, %p85
    %p87 = scmp.ne.s32.totalorder %s73, %s74
    %p88 = scmp.eq.s32.totalorder %s14, 8
    %p89 = por %p87, %p88
    %p91 = scmp.ne.s32.totalorder %s74, %s90
    %p92 = scmp.eq.s32.totalorder %s14, 0
    %p93 = por %p91, %p92
    %p94 = scmp.le.s32.totalorder 1, %s8
    %p95 = scmp.lt.s32.totalorder %s8, 10
    %p96 = pnand %p94, %p95
    %p97 = pneg %p96
    // Predicated region
    $region9: #{spectral_conv2d_forward.2} parent=5 // pred_check
      _
    $region10: #{spectral_conv2d_forward.2} parent=5 // pred_check_branch
      %99 = sbr.rel (%p96) target = $region12
    $region11: #{spectral_conv2d_forward.2} parent=5 // pred_region
      %s100 = ssub.s32 %s8, 1
    $region12: #{spectral_conv2d_forward.2} parent=5 // pred_fallthru
      _
    %p101 = scmp.lt.s32.totalorder %s8, 9
    // Predicated region
    $region13: #{spectral_conv2d_forward.2} parent=5 // pred_check
      %p102 = pneg %p101
    $region14: #{spectral_conv2d_forward.2} parent=5 // pred_check_branch
      %104 = sbr.rel (%p102) target = $region16
    $region15: #{spectral_conv2d_forward.2} parent=5 // pred_region
      // Predicated region
      $region17: #{spectral_conv2d_forward.2} parent=15 // pred_check
        %p105 = pneg %p28
      $region18: #{spectral_conv2d_forward.2} parent=15 // pred_check_branch
        %107 = sbr.rel (%p105) target = $region20
      $region19: #{spectral_conv2d_forward.2} parent=15 // pred_region
        %s108 = smul.u32 8, %s8
        %p109 = scmp.lt.s32.totalorder %s108, 71
        %s110 = scalar_select %p109, %s108, 71
        %s111 = smul.addr %s110, 2
        %s112 = scalar_lea.vmem %s0, %s111
        %s113 = smul.u32 8, %s8
      $region20: #{spectral_conv2d_forward.2} parent=15 // pred_fallthru
        _
      // Predicated region
      $region21: #{spectral_conv2d_forward.2} parent=15 // pred_check
        %p114 = pneg %p54
      $region22: #{spectral_conv2d_forward.2} parent=15 // pred_check_branch
        %116 = sbr.rel (%p114) target = $region24
      $region23: #{spectral_conv2d_forward.2} parent=15 // pred_region
        %s117 = smul.u32 8, %s8
        %p118 = scmp.lt.s32.totalorder %s117, 71
        %s119 = scalar_select %p118, %s117, 71
        %s120 = smul.addr %s119, 8
        %s121 = scalar_lea.vmem %s1, %s120
        %s122 = smul.u32 8, %s8
      $region24: #{spectral_conv2d_forward.2} parent=15 // pred_fallthru
        _
    $region16: #{spectral_conv2d_forward.2} parent=5 // pred_fallthru
      _
    %p123 = scmp.le.s32.totalorder 1, %s8
    %p124 = scmp.lt.s32.totalorder %s8, 10
    %p125 = pnand %p123, %p124
    %p126 = pneg %p125
    // Predicated region
    $region25: #{spectral_conv2d_forward.2} parent=5 // pred_check
      _
    $region26: #{spectral_conv2d_forward.2} parent=5 // pred_check_branch
      %128 = sbr.rel (%p125) target = $region28
    $region27: #{spectral_conv2d_forward.2} parent=5 // pred_region
      %s129 = ssub.s32 %s8, 1
      %s130 = smul.u32 8, %s13
      %p131 = scmp.lt.s32.totalorder %s130, 71
      %s132 = scalar_select %p131, %s130, 71
      %s133 = smul.addr %s132, 2
      %s134 = scalar_lea.vmem %s0, %s133
      %p135 = pneg %p34
      %p136 = pneg %p31
      %s137 = smul.u32 8, %s13
      %p138 = scmp.lt.s32.totalorder %s137, 71
      %s139 = scalar_select %p138, %s137, 71
      %s140 = smul.addr %s139, 8
      %s141 = scalar_lea.vmem %s1, %s140
      %p142 = pneg %p60
      %p143 = pneg %p57
      %p144 = pneg %p86
      %p145 = pneg %p83
      %s146 = smul.u32 8, %s13
      %p147 = scmp.lt.s32.totalorder %s146, 71
      %s148 = scalar_select %p147, %s146, 71
      %s149 = smul.addr %s148, 2
      %s150 = scalar_lea.vmem %s2, %s149
      %s151 = smul.u32 8, %s13
      %p152 = scmp.lt.s32.totalorder %s151, 71
      %s153 = scalar_select %p152, %s151, 71
      %s154 = smul.addr %s153, 2
      %s155 = scalar_lea.vmem %s0, %s154
      %s156 = smul.u32 8, %s13
      %s157 = smul.u32 8, %s13
      %p158 = scmp.lt.s32.totalorder %s157, 71
      %s159 = scalar_select %p158, %s157, 71
      %s160 = smul.addr %s159, 8
      %s161 = scalar_lea.vmem %s1, %s160
      %s162 = smul.u32 8, %s13
      %s163 = smul.u32 8, %s13
      %p164 = scmp.lt.s32.totalorder %s163, 71
      %s165 = scalar_select %p164, %s163, 71
      %s166 = smul.addr %s165, 2
      %s167 = scalar_lea.vmem %s2, %s166
      %s168 = smul.u32 8, %s13
      %v169 = vld [vmem:[%s155] sm:$0x3]
      %v170 = vld [vmem:[%s155 + $0x2] sm:$0x3]
      %v171 = vld [vmem:[%s155 + $0x4] sm:$0x3]
      %v172 = vld [vmem:[%s155 + $0x6] sm:$0x3]
      %v173 = vld [vmem:[%s155 + $0x8] sm:$0x3]
      %v174 = vld [vmem:[%s155 + $0xa] sm:$0x3]
      %v175 = vld [vmem:[%s155 + $0xc] sm:$0x3]
      %v176 = vld [vmem:[%s155 + $0xe] sm:$0x3]
      %v177 = vld [vmem:[%s161] sm:$0xff]
      %v178 = vld [vmem:[%s161 + $0x8] sm:$0xff]
      %v179 = vld [vmem:[%s161 + $0x10] sm:$0xff]
      %v180 = vld [vmem:[%s161 + $0x18] sm:$0xff]
      %v181 = vld [vmem:[%s161 + $0x20] sm:$0xff]
      %v182 = vld [vmem:[%s161 + $0x28] sm:$0xff]
      %v183 = vld [vmem:[%s161 + $0x30] sm:$0xff]
      %v184 = vld [vmem:[%s161 + $0x38] sm:$0xff]
      %vm185 = vcmask 64512
      %v187 = vsel %vm185, %v169, 0
      %189 = vmatprep.subr.mxu0 0.0
      %190 = vmatpush1.msra.mxu0 %v177
      %191 = vmatprep.subr.mxu0 0.0
      %192 = vmatpush1.msra.mxu0 0.0
      %193 = vmatprep.subr.mxu0 0.0
      %194 = vmatpush1.msra.mxu0 0.0
      %195 = vmatprep.subr.mxu0 0.0
      %196 = vmatpush1.msra.mxu0 0.0
      %197 = vmatprep.subr.mxu0 0.0
      %198 = vmatpush1.msra.mxu0 0.0
      %199 = vmatprep.subr.mxu0 0.0
      %200 = vmatpush1.msra.mxu0 0.0
      %201 = vmatprep.subr.mxu0 0.0
      %202 = vmatpush1.msra.mxu0 0.0
      %203 = vmatprep.subr.mxu0 0.0
      %204 = vmatpush1.msra.mxu0 0.0
      %205 = vmatprep.subr.mxu0 0.0
      %206 = vmatpush1.msra.mxu0 0.0
      %207 = vmatprep.subr.mxu0 0.0
      %208 = vmatpush1.msra.mxu0 0.0
      %209 = vmatprep.subr.mxu0 0.0
      %210 = vmatpush1.msra.mxu0 0.0
      %211 = vmatprep.subr.mxu0 0.0
      %212 = vmatpush1.msra.mxu0 0.0
      %213 = vmatprep.subr.mxu0 0.0
      %214 = vmatpush1.msra.mxu0 0.0
      %215 = vmatprep.subr.mxu0 0.0
      %216 = vmatpush1.msra.mxu0 0.0
      %217 = vmatprep.subr.mxu0 0.0
      %218 = vmatpush1.msra.mxu0 0.0
      %219 = vmatprep.subr.mxu0 0.0
      %220 = vmatpush1.msra.mxu0 0.0
      %221 = vmatprep.subr.mxu0 0.0
      %222 = vmatpush1.msra.mxu0 0.0
      %223 = vmatprep.subr.mxu0 0.0
      %224 = vmatpush1.msra.mxu0 0.0
      %225 = vmatprep.subr.mxu0 0.0
      %226 = vmatpush1.msra.mxu0 0.0
      %227 = vmatprep.subr.mxu0 0.0
      %228 = vmatpush1.msra.mxu0 0.0
      %229 = vmatprep.subr.mxu0 0.0
      %230 = vmatpush1.msra.mxu0 0.0
      %231 = vmatprep.subr.mxu0 0.0
      %232 = vmatpush1.msra.mxu0 0.0
      %233 = vmatprep.subr.mxu0 0.0
      %234 = vmatpush1.msra.mxu0 0.0
      %235 = vmatprep.subr.mxu0 0.0
      %236 = vmatpush1.msra.mxu0 0.0
      %237 = vmatprep.subr.mxu0 0.0
      %238 = vmatpush1.msra.mxu0 0.0
      %239 = vmatprep.subr.mxu0 0.0
      %240 = vmatpush1.msra.mxu0 0.0
      %241 = vmatprep.subr.mxu0 0.0
      %242 = vmatpush1.msra.mxu0 0.0
      %243 = vmatprep.subr.mxu0 0.0
      %244 = vmatpush1.msra.mxu0 0.0
      %245 = vmatprep.subr.mxu0 0.0
      %246 = vmatpush1.msra.mxu0 0.0
      %247 = vmatprep.subr.mxu0 0.0
      %248 = vmatpush1.msra.mxu0 0.0
      %249 = vmatprep.subr.mxu0 0.0
      %250 = vmatpush1.msra.mxu0 0.0
      %251 = vmatprep.subr.mxu0 0.0
      %252 = vmatpush1.msra.mxu0 0.0
      %253 = vmatprep.mubr.f32.mxu0 0.0
      %254 = vmatmul.mubr.f32.gmra.mrb[0].mxu0 %v187
      %v255 = vpop.f32.mrb[0].mxu0
      %v256 = vadd.f32 0.0, %v255
      %v257 = vpop.f32.mrb[0].mxu0
      %258 = vdwg.mxu0
      %v260 = vsel %vm185, %v170, 0
      %262 = vmatprep.subr.mxu0 0.0
      %263 = vmatpush1.msra.mxu0 %v178
      %264 = vmatprep.subr.mxu0 0.0
      %265 = vmatpush1.msra.mxu0 0.0
      %266 = vmatprep.subr.mxu0 0.0
      %267 = vmatpush1.msra.mxu0 0.0
      %268 = vmatprep.subr.mxu0 0.0
      %269 = vmatpush1.msra.mxu0 0.0
      %270 = vmatprep.subr.mxu0 0.0
      %271 = vmatpush1.msra.mxu0 0.0
      %272 = vmatprep.subr.mxu0 0.0
      %273 = vmatpush1.msra.mxu0 0.0
      %274 = vmatprep.subr.mxu0 0.0
      %275 = vmatpush1.msra.mxu0 0.0
      %276 = vmatprep.subr.mxu0 0.0
      %277 = vmatpush1.msra.mxu0 0.0
      %278 = vmatprep.subr.mxu0 0.0
      %279 = vmatpush1.msra.mxu0 0.0
      %280 = vmatprep.subr.mxu0 0.0
      %281 = vmatpush1.msra.mxu0 0.0
      %282 = vmatprep.subr.mxu0 0.0
      %283 = vmatpush1.msra.mxu0 0.0
      %284 = vmatprep.subr.mxu0 0.0
      %285 = vmatpush1.msra.mxu0 0.0
      %286 = vmatprep.subr.mxu0 0.0
      %287 = vmatpush1.msra.mxu0 0.0
      %288 = vmatprep.subr.mxu0 0.0
      %289 = vmatpush1.msra.mxu0 0.0
      %290 = vmatprep.subr.mxu0 0.0
      %291 = vmatpush1.msra.mxu0 0.0
      %292 = vmatprep.subr.mxu0 0.0
      %293 = vmatpush1.msra.mxu0 0.0
      %294 = vmatprep.subr.mxu0 0.0
      %295 = vmatpush1.msra.mxu0 0.0
      %296 = vmatprep.subr.mxu0 0.0
      %297 = vmatpush1.msra.mxu0 0.0
      %298 = vmatprep.subr.mxu0 0.0
      %299 = vmatpush1.msra.mxu0 0.0
      %300 = vmatprep.subr.mxu0 0.0
      %301 = vmatpush1.msra.mxu0 0.0
      %302 = vmatprep.subr.mxu0 0.0
      %303 = vmatpush1.msra.mxu0 0.0
      %304 = vmatprep.subr.mxu0 0.0
      %305 = vmatpush1.msra.mxu0 0.0
      %306 = vmatprep.subr.mxu0 0.0
      %307 = vmatpush1.msra.mxu0 0.0
      %308 = vmatprep.subr.mxu0 0.0
      %309 = vmatpush1.msra.mxu0 0.0
      %310 = vmatprep.subr.mxu0 0.0
      %311 = vmatpush1.msra.mxu0 0.0
      %312 = vmatprep.subr.mxu0 0.0
      %313 = vmatpush1.msra.mxu0 0.0
      %314 = vmatprep.subr.mxu0 0.0
      %315 = vmatpush1.msra.mxu0 0.0
      %316 = vmatprep.subr.mxu0 0.0
      %317 = vmatpush1.msra.mxu0 0.0
      %318 = vmatprep.subr.mxu0 0.0
      %319 = vmatpush1.msra.mxu0 0.0
      %320 = vmatprep.subr.mxu0 0.0
      %321 = vmatpush1.msra.mxu0 0.0
      %322 = vmatprep.subr.mxu0 0.0
      %323 = vmatpush1.msra.mxu0 0.0
      %324 = vmatprep.subr.mxu0 0.0
      %325 = vmatpush1.msra.mxu0 0.0
      %326 = vmatprep.mubr.f32.mxu0 0.0
      %327 = vmatmul.mubr.f32.gmra.mrb[0].mxu0 %v260
      %v328 = vpop.f32.mrb[0].mxu0
      %v329 = vadd.f32 0.0, %v328
      %v330 = vpop.f32.mrb[0].mxu0
      %331 = vdwg.mxu0
      %v333 = vsel %vm185, %v171, 0
      %335 = vmatprep.subr.mxu0 0.0
      %336 = vmatpush1.msra.mxu0 %v179
      %337 = vmatprep.subr.mxu0 0.0
      %338 = vmatpush1.msra.mxu0 0.0
      %339 = vmatprep.subr.mxu0 0.0
      %340 = vmatpush1.msra.mxu0 0.0
      %341 = vmatprep.subr.mxu0 0.0
      %342 = vmatpush1.msra.mxu0 0.0
      %343 = vmatprep.subr.mxu0 0.0
      %344 = vmatpush1.msra.mxu0 0.0
      %345 = vmatprep.subr.mxu0 0.0
      %346 = vmatpush1.msra.mxu0 0.0
      %347 = vmatprep.subr.mxu0 0.0
      %348 = vmatpush1.msra.mxu0 0.0
      %349 = vmatprep.subr.mxu0 0.0
      %350 = vmatpush1.msra.mxu0 0.0
      %351 = vmatprep.subr.mxu0 0.0
      %352 = vmatpush1.msra.mxu0 0.0
      %353 = vmatprep.subr.mxu0 0.0
      %354 = vmatpush1.msra.mxu0 0.0
      %355 = vmatprep.subr.mxu0 0.0
      %356 = vmatpush1.msra.mxu0 0.0
      %357 = vmatprep.subr.mxu0 0.0
      %358 = vmatpush1.msra.mxu0 0.0
      %359 = vmatprep.subr.mxu0 0.0
      %360 = vmatpush1.msra.mxu0 0.0
      %361 = vmatprep.subr.mxu0 0.0
      %362 = vmatpush1.msra.mxu0 0.0
      %363 = vmatprep.subr.mxu0 0.0
      %364 = vmatpush1.msra.mxu0 0.0
      %365 = vmatprep.subr.mxu0 0.0
      %366 = vmatpush1.msra.mxu0 0.0
      %367 = vmatprep.subr.mxu0 0.0
      %368 = vmatpush1.msra.mxu0 0.0
      %369 = vmatprep.subr.mxu0 0.0
      %370 = vmatpush1.msra.mxu0 0.0
      %371 = vmatprep.subr.mxu0 0.0
      %372 = vmatpush1.msra.mxu0 0.0
      %373 = vmatprep.subr.mxu0 0.0
      %374 = vmatpush1.msra.mxu0 0.0
      %375 = vmatprep.subr.mxu0 0.0
      %376 = vmatpush1.msra.mxu0 0.0
      %377 = vmatprep.subr.mxu0 0.0
      %378 = vmatpush1.msra.mxu0 0.0
      %379 = vmatprep.subr.mxu0 0.0
      %380 = vmatpush1.msra.mxu0 0.0
      %381 = vmatprep.subr.mxu0 0.0
      %382 = vmatpush1.msra.mxu0 0.0
      %383 = vmatprep.subr.mxu0 0.0
      %384 = vmatpush1.msra.mxu0 0.0
      %385 = vmatprep.subr.mxu0 0.0
      %386 = vmatpush1.msra.mxu0 0.0
      %387 = vmatprep.subr.mxu0 0.0
      %388 = vmatpush1.msra.mxu0 0.0
      %389 = vmatprep.subr.mxu0 0.0
      %390 = vmatpush1.msra.mxu0 0.0
      %391 = vmatprep.subr.mxu0 0.0
      %392 = vmatpush1.msra.mxu0 0.0
      %393 = vmatprep.subr.mxu0 0.0
      %394 = vmatpush1.msra.mxu0 0.0
      %395 = vmatprep.subr.mxu0 0.0
      %396 = vmatpush1.msra.mxu0 0.0
      %397 = vmatprep.subr.mxu0 0.0
      %398 = vmatpush1.msra.mxu0 0.0
      %399 = vmatprep.mubr.f32.mxu0 0.0
      %400 = vmatmul.mubr.f32.gmra.mrb[0].mxu0 %v333
      %v401 = vpop.f32.mrb[0].mxu0
      %v402 = vadd.f32 0.0, %v401
      %v403 = vpop.f32.mrb[0].mxu0
      %404 = vdwg.mxu0
      %v406 = vsel %vm185, %v172, 0
      %408 = vmatprep.subr.mxu0 0.0
      %409 = vmatpush1.msra.mxu0 %v180
      %410 = vmatprep.subr.mxu0 0.0
      %411 = vmatpush1.msra.mxu0 0.0
      %412 = vmatprep.subr.mxu0 0.0
      %413 = vmatpush1.msra.mxu0 0.0
      %414 = vmatprep.subr.mxu0 0.0
      %415 = vmatpush1.msra.mxu0 0.0
      %416 = vmatprep.subr.mxu0 0.0
      %417 = vmatpush1.msra.mxu0 0.0
      %418 = vmatprep.subr.mxu0 0.0
      %419 = vmatpush1.msra.mxu0 0.0
      %420 = vmatprep.subr.mxu0 0.0
      %421 = vmatpush1.msra.mxu0 0.0
      %422 = vmatprep.subr.mxu0 0.0
      %423 = vmatpush1.msra.mxu0 0.0
      %424 = vmatprep.subr.mxu0 0.0
      %425 = vmatpush1.msra.mxu0 0.0
      %426 = vmatprep.subr.mxu0 0.0
      %427 = vmatpush1.msra.mxu0 0.0
      %428 = vmatprep.subr.mxu0 0.0
      %429 = vmatpush1.msra.mxu0 0.0
      %430 = vmatprep.subr.mxu0 0.0
      %431 = vmatpush1.msra.mxu0 0.0
      %432 = vmatprep.subr.mxu0 0.0
      %433 = vmatpush1.msra.mxu0 0.0
      %434 = vmatprep.subr.mxu0 0.0
      %435 = vmatpush1.msra.mxu0 0.0
      %436 = vmatprep.subr.mxu0 0.0
      %437 = vmatpush1.msra.mxu0 0.0
      %438 = vmatprep.subr.mxu0 0.0
      %439 = vmatpush1.msra.mxu0 0.0
      %440 = vmatprep.subr.mxu0 0.0
      %441 = vmatpush1.msra.mxu0 0.0
      %442 = vmatprep.subr.mxu0 0.0
      %443 = vmatpush1.msra.mxu0 0.0
      %444 = vmatprep.subr.mxu0 0.0
      %445 = vmatpush1.msra.mxu0 0.0
      %446 = vmatprep.subr.mxu0 0.0
      %447 = vmatpush1.msra.mxu0 0.0
      %448 = vmatprep.subr.mxu0 0.0
      %449 = vmatpush1.msra.mxu0 0.0
      %450 = vmatprep.subr.mxu0 0.0
      %451 = vmatpush1.msra.mxu0 0.0
      %452 = vmatprep.subr.mxu0 0.0
      %453 = vmatpush1.msra.mxu0 0.0
      %454 = vmatprep.subr.mxu0 0.0
      %455 = vmatpush1.msra.mxu0 0.0
      %456 = vmatprep.subr.mxu0 0.0
      %457 = vmatpush1.msra.mxu0 0.0
      %458 = vmatprep.subr.mxu0 0.0
      %459 = vmatpush1.msra.mxu0 0.0
      %460 = vmatprep.subr.mxu0 0.0
      %461 = vmatpush1.msra.mxu0 0.0
      %462 = vmatprep.subr.mxu0 0.0
      %463 = vmatpush1.msra.mxu0 0.0
      %464 = vmatprep.subr.mxu0 0.0
      %465 = vmatpush1.msra.mxu0 0.0
      %466 = vmatprep.subr.mxu0 0.0
      %467 = vmatpush1.msra.mxu0 0.0
      %468 = vmatprep.subr.mxu0 0.0
      %469 = vmatpush1.msra.mxu0 0.0
      %470 = vmatprep.subr.mxu0 0.0
      %471 = vmatpush1.msra.mxu0 0.0
      %472 = vmatprep.mubr.f32.mxu0 0.0
      %473 = vmatmul.mubr.f32.gmra.mrb[0].mxu0 %v406
      %v474 = vpop.f32.mrb[0].mxu0
      %v475 = vadd.f32 0.0, %v474
      %v476 = vpop.f32.mrb[0].mxu0
      %477 = vdwg.mxu0
      %v479 = vsel %vm185, %v173, 0
      %481 = vmatprep.subr.mxu0 0.0
      %482 = vmatpush1.msra.mxu0 %v181
      %483 = vmatprep.subr.mxu0 0.0
      %484 = vmatpush1.msra.mxu0 0.0
      %485 = vmatprep.subr.mxu0 0.0
      %486 = vmatpush1.msra.mxu0 0.0
      %487 = vmatprep.subr.mxu0 0.0
      %488 = vmatpush1.msra.mxu0 0.0
      %489 = vmatprep.subr.mxu0 0.0
      %490 = vmatpush1.msra.mxu0 0.0
      %491 = vmatprep.subr.mxu0 0.0
      %492 = vmatpush1.msra.mxu0 0.0
      %493 = vmatprep.subr.mxu0 0.0
      %494 = vmatpush1.msra.mxu0 0.0
      %495 = vmatprep.subr.mxu0 0.0
      %496 = vmatpush1.msra.mxu0 0.0
      %497 = vmatprep.subr.mxu0 0.0
      %498 = vmatpush1.msra.mxu0 0.0
      %499 = vmatprep.subr.mxu0 0.0
      %500 = vmatpush1.msra.mxu0 0.0
      %501 = vmatprep.subr.mxu0 0.0
      %502 = vmatpush1.msra.mxu0 0.0
      %503 = vmatprep.subr.mxu0 0.0
      %504 = vmatpush1.msra.mxu0 0.0
      %505 = vmatprep.subr.mxu0 0.0
      %506 = vmatpush1.msra.mxu0 0.0
      %507 = vmatprep.subr.mxu0 0.0
      %508 = vmatpush1.msra.mxu0 0.0
      %509 = vmatprep.subr.mxu0 0.0
      %510 = vmatpush1.msra.mxu0 0.0
      %511 = vmatprep.subr.mxu0 0.0
      %512 = vmatpush1.msra.mxu0 0.0
      %513 = vmatprep.subr.mxu0 0.0
      %514 = vmatpush1.msra.mxu0 0.0
      %515 = vmatprep.subr.mxu0 0.0
      %516 = vmatpush1.msra.mxu0 0.0
      %517 = vmatprep.subr.mxu0 0.0
      %518 = vmatpush1.msra.mxu0 0.0
      %519 = vmatprep.subr.mxu0 0.0
      %520 = vmatpush1.msra.mxu0 0.0
      %521 = vmatprep.subr.mxu0 0.0
      %522 = vmatpush1.msra.mxu0 0.0
      %523 = vmatprep.subr.mxu0 0.0
      %524 = vmatpush1.msra.mxu0 0.0
      %525 = vmatprep.subr.mxu0 0.0
      %526 = vmatpush1.msra.mxu0 0.0
      %527 = vmatprep.subr.mxu0 0.0
      %528 = vmatpush1.msra.mxu0 0.0
      %529 = vmatprep.subr.mxu0 0.0
      %530 = vmatpush1.msra.mxu0 0.0
      %531 = vmatprep.subr.mxu0 0.0
      %532 = vmatpush1.msra.mxu0 0.0
      %533 = vmatprep.subr.mxu0 0.0
      %534 = vmatpush1.msra.mxu0 0.0
      %535 = vmatprep.subr.mxu0 0.0
      %536 = vmatpush1.msra.mxu0 0.0
      %537 = vmatprep.subr.mxu0 0.0
      %538 = vmatpush1.msra.mxu0 0.0
      %539 = vmatprep.subr.mxu0 0.0
      %540 = vmatpush1.msra.mxu0 0.0
      %541 = vmatprep.subr.mxu0 0.0
      %542 = vmatpush1.msra.mxu0 0.0
      %543 = vmatprep.subr.mxu0 0.0
      %544 = vmatpush1.msra.mxu0 0.0
      %545 = vmatprep.mubr.f32.mxu0 0.0
      %546 = vmatmul.mubr.f32.gmra.mrb[0].mxu0 %v479
      %v547 = vpop.f32.mrb[0].mxu0
      %v548 = vadd.f32 0.0, %v547
      %v549 = vpop.f32.mrb[0].mxu0
      %550 = vdwg.mxu0
      %v552 = vsel %vm185, %v174, 0
      %554 = vmatprep.subr.mxu0 0.0
      %555 = vmatpush1.msra.mxu0 %v182
      %556 = vmatprep.subr.mxu0 0.0
      %557 = vmatpush1.msra.mxu0 0.0
      %558 = vmatprep.subr.mxu0 0.0
      %559 = vmatpush1.msra.mxu0 0.0
      %560 = vmatprep.subr.mxu0 0.0
      %561 = vmatpush1.msra.mxu0 0.0
      %562 = vmatprep.subr.mxu0 0.0
      %563 = vmatpush1.msra.mxu0 0.0
      %564 = vmatprep.subr.mxu0 0.0
      %565 = vmatpush1.msra.mxu0 0.0
      %566 = vmatprep.subr.mxu0 0.0
      %567 = vmatpush1.msra.mxu0 0.0
      %568 = vmatprep.subr.mxu0 0.0
      %569 = vmatpush1.msra.mxu0 0.0
      %570 = vmatprep.subr.mxu0 0.0
      %571 = vmatpush1.msra.mxu0 0.0
      %572 = vmatprep.subr.mxu0 0.0
      %573 = vmatpush1.msra.mxu0 0.0
      %574 = vmatprep.subr.mxu0 0.0
      %575 = vmatpush1.msra.mxu0 0.0
      %576 = vmatprep.subr.mxu0 0.0
      %577 = vmatpush1.msra.mxu0 0.0
      %578 = vmatprep.subr.mxu0 0.0
      %579 = vmatpush1.msra.mxu0 0.0
      %580 = vmatprep.subr.mxu0 0.0
      %581 = vmatpush1.msra.mxu0 0.0
      %582 = vmatprep.subr.mxu0 0.0
      %583 = vmatpush1.msra.mxu0 0.0
      %584 = vmatprep.subr.mxu0 0.0
      %585 = vmatpush1.msra.mxu0 0.0
      %586 = vmatprep.subr.mxu0 0.0
      %587 = vmatpush1.msra.mxu0 0.0
      %588 = vmatprep.subr.mxu0 0.0
      %589 = vmatpush1.msra.mxu0 0.0
      %590 = vmatprep.subr.mxu0 0.0
      %591 = vmatpush1.msra.mxu0 0.0
      %592 = vmatprep.subr.mxu0 0.0
      %593 = vmatpush1.msra.mxu0 0.0
      %594 = vmatprep.subr.mxu0 0.0
      %595 = vmatpush1.msra.mxu0 0.0
      %596 = vmatprep.subr.mxu0 0.0
      %597 = vmatpush1.msra.mxu0 0.0
      %598 = vmatprep.subr.mxu0 0.0
      %599 = vmatpush1.msra.mxu0 0.0
      %600 = vmatprep.subr.mxu0 0.0
      %601 = vmatpush1.msra.mxu0 0.0
      %602 = vmatprep.subr.mxu0 0.0
      %603 = vmatpush1.msra.mxu0 0.0
      %604 = vmatprep.subr.mxu0 0.0
      %605 = vmatpush1.msra.mxu0 0.0
      %606 = vmatprep.subr.mxu0 0.0
      %607 = vmatpush1.msra.mxu0 0.0
      %608 = vmatprep.subr.mxu0 0.0
      %609 = vmatpush1.msra.mxu0 0.0
      %610 = vmatprep.subr.mxu0 0.0
      %611 = vmatpush1.msra.mxu0 0.0
      %612 = vmatprep.subr.mxu0 0.0
      %613 = vmatpush1.msra.mxu0 0.0
      %614 = vmatprep.subr.mxu0 0.0
      %615 = vmatpush1.msra.mxu0 0.0
      %616 = vmatprep.subr.mxu0 0.0
      %617 = vmatpush1.msra.mxu0 0.0
      %618 = vmatprep.mubr.f32.mxu0 0.0
      %619 = vmatmul.mubr.f32.gmra.mrb[0].mxu0 %v552
      %v620 = vpop.f32.mrb[0].mxu0
      %v621 = vadd.f32 0.0, %v620
      %v622 = vpop.f32.mrb[0].mxu0
      %623 = vdwg.mxu0
      %v625 = vsel %vm185, %v175, 0
      %627 = vmatprep.subr.mxu0 0.0
      %628 = vmatpush1.msra.mxu0 %v183
      %629 = vmatprep.subr.mxu0 0.0
      %630 = vmatpush1.msra.mxu0 0.0
      %631 = vmatprep.subr.mxu0 0.0
      %632 = vmatpush1.msra.mxu0 0.0
      %633 = vmatprep.subr.mxu0 0.0
      %634 = vmatpush1.msra.mxu0 0.0
      %635 = vmatprep.subr.mxu0 0.0
      %636 = vmatpush1.msra.mxu0 0.0
      %637 = vmatprep.subr.mxu0 0.0
      %638 = vmatpush1.msra.mxu0 0.0
      %639 = vmatprep.subr.mxu0 0.0
      %640 = vmatpush1.msra.mxu0 0.0
      %641 = vmatprep.subr.mxu0 0.0
      %642 = vmatpush1.msra.mxu0 0.0
      %643 = vmatprep.subr.mxu0 0.0
      %644 = vmatpush1.msra.mxu0 0.0
      %645 = vmatprep.subr.mxu0 0.0
      %646 = vmatpush1.msra.mxu0 0.0
      %647 = vmatprep.subr.mxu0 0.0
      %648 = vmatpush1.msra.mxu0 0.0
      %649 = vmatprep.subr.mxu0 0.0
      %650 = vmatpush1.msra.mxu0 0.0
      %651 = vmatprep.subr.mxu0 0.0
      %652 = vmatpush1.msra.mxu0 0.0
      %653 = vmatprep.subr.mxu0 0.0
      %654 = vmatpush1.msra.mxu0 0.0
      %655 = vmatprep.subr.mxu0 0.0
      %656 = vmatpush1.msra.mxu0 0.0
      %657 = vmatprep.subr.mxu0 0.0
      %658 = vmatpush1.msra.mxu0 0.0
      %659 = vmatprep.subr.mxu0 0.0
      %660 = vmatpush1.msra.mxu0 0.0
      %661 = vmatprep.subr.mxu0 0.0
      %662 = vmatpush1.msra.mxu0 0.0
      %663 = vmatprep.subr.mxu0 0.0
      %664 = vmatpush1.msra.mxu0 0.0
      %665 = vmatprep.subr.mxu0 0.0
      %666 = vmatpush1.msra.mxu0 0.0
      %667 = vmatprep.subr.mxu0 0.0
      %668 = vmatpush1.msra.mxu0 0.0
      %669 = vmatprep.subr.mxu0 0.0
      %670 = vmatpush1.msra.mxu0 0.0
      %671 = vmatprep.subr.mxu0 0.0
      %672 = vmatpush1.msra.mxu0 0.0
      %673 = vmatprep.subr.mxu0 0.0
      %674 = vmatpush1.msra.mxu0 0.0
      %675 = vmatprep.subr.mxu0 0.0
      %676 = vmatpush1.msra.mxu0 0.0
      %677 = vmatprep.subr.mxu0 0.0
      %678 = vmatpush1.msra.mxu0 0.0
      %679 = vmatprep.subr.mxu0 0.0
      %680 = vmatpush1.msra.mxu0 0.0
      %681 = vmatprep.subr.mxu0 0.0
      %682 = vmatpush1.msra.mxu0 0.0
      %683 = vmatprep.subr.mxu0 0.0
      %684 = vmatpush1.msra.mxu0 0.0
      %685 = vmatprep.subr.mxu0 0.0
      %686 = vmatpush1.msra.mxu0 0.0
      %687 = vmatprep.subr.mxu0 0.0
      %688 = vmatpush1.msra.mxu0 0.0
      %689 = vmatprep.subr.mxu0 0.0
      %690 = vmatpush1.msra.mxu0 0.0
      %691 = vmatprep.mubr.f32.mxu0 0.0
      %692 = vmatmul.mubr.f32.gmra.mrb[0].mxu0 %v625
      %v693 = vpop.f32.mrb[0].mxu0
      %v694 = vadd.f32 0.0, %v693
      %v695 = vpop.f32.mrb[0].mxu0
      %696 = vdwg.mxu0
      %v698 = vsel %vm185, %v176, 0
      %700 = vmatprep.subr.mxu0 0.0
      %701 = vmatpush1.msra.mxu0 %v184
      %702 = vmatprep.subr.mxu0 0.0
      %703 = vmatpush1.msra.mxu0 0.0
      %704 = vmatprep.subr.mxu0 0.0
      %705 = vmatpush1.msra.mxu0 0.0
      %706 = vmatprep.subr.mxu0 0.0
      %707 = vmatpush1.msra.mxu0 0.0
      %708 = vmatprep.subr.mxu0 0.0
      %709 = vmatpush1.msra.mxu0 0.0
      %710 = vmatprep.subr.mxu0 0.0
      %711 = vmatpush1.msra.mxu0 0.0
      %712 = vmatprep.subr.mxu0 0.0
      %713 = vmatpush1.msra.mxu0 0.0
      %714 = vmatprep.subr.mxu0 0.0
      %715 = vmatpush1.msra.mxu0 0.0
      %716 = vmatprep.subr.mxu0 0.0
      %717 = vmatpush1.msra.mxu0 0.0
      %718 = vmatprep.subr.mxu0 0.0
      %719 = vmatpush1.msra.mxu0 0.0
      %720 = vmatprep.subr.mxu0 0.0
      %721 = vmatpush1.msra.mxu0 0.0
      %722 = vmatprep.subr.mxu0 0.0
      %723 = vmatpush1.msra.mxu0 0.0
      %724 = vmatprep.subr.mxu0 0.0
      %725 = vmatpush1.msra.mxu0 0.0
      %726 = vmatprep.subr.mxu0 0.0
      %727 = vmatpush1.msra.mxu0 0.0
      %728 = vmatprep.subr.mxu0 0.0
      %729 = vmatpush1.msra.mxu0 0.0
      %730 = vmatprep.subr.mxu0 0.0
      %731 = vmatpush1.msra.mxu0 0.0
      %732 = vmatprep.subr.mxu0 0.0
      %733 = vmatpush1.msra.mxu0 0.0
      %734 = vmatprep.subr.mxu0 0.0
      %735 = vmatpush1.msra.mxu0 0.0
      %736 = vmatprep.subr.mxu0 0.0
      %737 = vmatpush1.msra.mxu0 0.0
      %738 = vmatprep.subr.mxu0 0.0
      %739 = vmatpush1.msra.mxu0 0.0
      %740 = vmatprep.subr.mxu0 0.0
      %741 = vmatpush1.msra.mxu0 0.0
      %742 = vmatprep.subr.mxu0 0.0
      %743 = vmatpush1.msra.mxu0 0.0
      %744 = vmatprep.subr.mxu0 0.0
      %745 = vmatpush1.msra.mxu0 0.0
      %746 = vmatprep.subr.mxu0 0.0
      %747 = vmatpush1.msra.mxu0 0.0
      %748 = vmatprep.subr.mxu0 0.0
      %749 = vmatpush1.msra.mxu0 0.0
      %750 = vmatprep.subr.mxu0 0.0
      %751 = vmatpush1.msra.mxu0 0.0
      %752 = vmatprep.subr.mxu0 0.0
      %753 = vmatpush1.msra.mxu0 0.0
      %754 = vmatprep.subr.mxu0 0.0
      %755 = vmatpush1.msra.mxu0 0.0
      %756 = vmatprep.subr.mxu0 0.0
      %757 = vmatpush1.msra.mxu0 0.0
      %758 = vmatprep.subr.mxu0 0.0
      %759 = vmatpush1.msra.mxu0 0.0
      %760 = vmatprep.subr.mxu0 0.0
      %761 = vmatpush1.msra.mxu0 0.0
      %762 = vmatprep.subr.mxu0 0.0
      %763 = vmatpush1.msra.mxu0 0.0
      %764 = vmatprep.mubr.f32.mxu0 0.0
      %765 = vmatmul.mubr.f32.gmra.mrb[0].mxu0 %v698
      %v766 = vpop.f32.mrb[0].mxu0
      %v767 = vadd.f32 0.0, %v766
      %v768 = vpop.f32.mrb[0].mxu0
      %769 = vdwg.mxu0
      %vm770 = vcmask 58368
      %771 = vst.msk [vmem:[%s167] sm:$0x3] %vm770, %v256
      %772 = vst.msk [vmem:[%s167 + $0x2] sm:$0x3] %vm770, %v329
      %773 = vst.msk [vmem:[%s167 + $0x4] sm:$0x3] %vm770, %v402
      %774 = vst.msk [vmem:[%s167 + $0x6] sm:$0x3] %vm770, %v475
      %775 = vst.msk [vmem:[%s167 + $0x8] sm:$0x3] %vm770, %v548
      %776 = vst.msk [vmem:[%s167 + $0xa] sm:$0x3] %vm770, %v621
      %777 = vst.msk [vmem:[%s167 + $0xc] sm:$0x3] %vm770, %v694
      %778 = vst.msk [vmem:[%s167 + $0xe] sm:$0x3] %vm770, %v767
      %s779 = smul.u32 8, %s13
      %p780 = scmp.lt.s32.totalorder %s779, 71
      %s781 = scalar_select %p780, %s779, 71
      %s782 = smul.addr %s781, 2
      %s783 = scalar_lea.vmem %s2, %s782
      // Predicated region
      $region29: #{spectral_conv2d_forward.2} parent=27 // pred_check
        %p784 = pneg %p83
      $region30: #{spectral_conv2d_forward.2} parent=27 // pred_check_branch
        %786 = sbr.rel (%p784) target = $region32
      $region31: #{spectral_conv2d_forward.2} parent=27 // pred_region
        %s787 = smul.u32 8, %s13
      $region32: #{spectral_conv2d_forward.2} parent=27 // pred_fallthru
        _
    $region28: #{spectral_conv2d_forward.2} parent=5 // pred_fallthru
      _
    %p788 = scmp.le.s32.totalorder 2, %s8
    // Predicated region
    $region33: #{spectral_conv2d_forward.2} parent=5 // pred_check
      %p789 = pneg %p788
    $region34: #{spectral_conv2d_forward.2} parent=5 // pred_check_branch
      %791 = sbr.rel (%p789) target = $region36
    $region35: #{spectral_conv2d_forward.2} parent=5 // pred_region
      %s792 = ssub.s32 %s8, 2
      // Predicated region
      $region37: #{spectral_conv2d_forward.2} parent=35 // pred_check
        %p793 = pneg %p89
      $region38: #{spectral_conv2d_forward.2} parent=35 // pred_check_branch
        %795 = sbr.rel (%p793) target = $region40
      $region39: #{spectral_conv2d_forward.2} parent=35 // pred_region
        %s796 = smul.u32 8, %s14
        %p797 = scmp.lt.s32.totalorder %s796, 71
        %s798 = scalar_select %p797, %s796, 71
        %s799 = smul.addr %s798, 2
        %s800 = scalar_lea.vmem %s2, %s799
      $region40: #{spectral_conv2d_forward.2} parent=35 // pred_fallthru
        _
    $region36: #{spectral_conv2d_forward.2} parent=5 // pred_fallthru
      _
  $region6: #{spectral_conv2d_forward.2} parent=0 // loop_footer
    %s12 = sadd.s32 1, %s8
  $region7: #{spectral_conv2d_forward.2} parent=0 // loop_footer_branch
    %7 = sbr.rel target = $region3
  $region8: #{spectral_conv2d_forward.2} parent=0 // loop_exit
    _

// kernel: reverse.0
$region0: #{reverse.0}
  %s0 = inlined_call_operand.vmem [shape: f32[2,4,16,7], index: 0, kind: input, shape index: {}]
  %s1 = inlined_call_operand.vmem [shape: f32[2,4,16,7], index: 1, kind: output, shape index: {}]
  $region1: #{reverse.0} parent=0
    #allocation0 [shape = 'u8[65536]{0}', space=vmem, size = 0x10000, scoped, tag = 'operand span for operand 0']
    #allocation1 [shape = 'u8[32768]{0}', space=vmem, size = 0x8000, scoped, tag = 'operand span for operand 1']
    %s2 = scalar_lea.vmem [#allocation0], 8
    // Predicated region
    $region2: #{reverse.0} parent=1 // pred_check
      _
    $region3: #{reverse.0} parent=1 // pred_check_branch
      %4 = sbr.rel (0) target = $region5
    $region4: #{reverse.0} parent=1 // pred_region
      // Predicated region
      $region6: #{reverse.0} parent=4 // pred_check
        _
      $region7: #{reverse.0} parent=4 // pred_check_branch
        %6 = sbr.rel (0) target = $region9
      $region8: #{reverse.0} parent=4 // pred_region
        // Predicated region
        $region21: #{reverse.0} parent=8 // pred_check
          _
        $region22: #{reverse.0} parent=8 // pred_check_branch
          %35 = sbr.rel (0) target = $region24
        $region23: #{reverse.0} parent=8 // pred_region
          loop: start=0, step=1, limit=1
          $region25: #{reverse.0} parent=23 // loop_pre_header
            _
          $region26: #{reverse.0} parent=23 // loop_header
            %s37 = sphi 0, %s41
            %p38 = scmp.ge.s32.totalorder %s37, 1
            %s42 = sphi %s0, %s0
            %s43 = sphi %s2, %s2
          $region27: #{reverse.0} parent=23 // loop_header_branch
            %40 = sbr.rel (%p38) target = $region31
          $region28: #{reverse.0} parent=23 // loop_body
            %v44 = vld [vmem:[%s42] sm:$0xff]
            %45 = vst [vmem:[%s43] sm:$0xff] %v44
            %v46 = vld [vmem:[%s42 + $0x8] sm:$0xff]
            %47 = vst [vmem:[%s43 + $0x10] sm:$0xff] %v46
            %v48 = vld [vmem:[%s42 + $0x10] sm:$0xff]
            %49 = vst [vmem:[%s43 + $0x20] sm:$0xff] %v48
            %v50 = vld [vmem:[%s42 + $0x18] sm:$0xff]
            %51 = vst [vmem:[%s43 + $0x30] sm:$0xff] %v50
            %v52 = vld [vmem:[%s42 + $0x20] sm:$0xff]
            %53 = vst [vmem:[%s43 + $0x40] sm:$0xff] %v52
            %v54 = vld [vmem:[%s42 + $0x28] sm:$0xff]
            %55 = vst [vmem:[%s43 + $0x50] sm:$0xff] %v54
            %v56 = vld [vmem:[%s42 + $0x30] sm:$0xff]
            %57 = vst [vmem:[%s43 + $0x60] sm:$0xff] %v56
            %v58 = vld [vmem:[%s42 + $0x38] sm:$0xff]
            %59 = vst [vmem:[%s43 + $0x70] sm:$0xff] %v58
          $region29: #{reverse.0} parent=23 // loop_footer
            %s41 = sadd.s32 1, %s37
          $region30: #{reverse.0} parent=23 // loop_footer_branch
            %36 = sbr.rel target = $region26
          $region31: #{reverse.0} parent=23 // loop_exit
            _
        $region24: #{reverse.0} parent=8 // pred_fallthru
          _
        // Predicated region
        $region32: #{reverse.0} parent=8 // pred_check
          _
        $region33: #{reverse.0} parent=8 // pred_check_branch
          %61 = sbr.rel target = $region35
        $region34: #{reverse.0} parent=8 // pred_region
          _
        $region35: #{reverse.0} parent=8 // pred_fallthru
          _
      $region9: #{reverse.0} parent=4 // pred_fallthru
        _
      // Predicated region
      $region10: #{reverse.0} parent=4 // pred_check
        _
      $region11: #{reverse.0} parent=4 // pred_check_branch
        %8 = sbr.rel target = $region13
      $region12: #{reverse.0} parent=4 // pred_region
        loop: start=0, step=1, limit=1
        $region14: #{reverse.0} parent=12 // loop_pre_header
          _
        $region15: #{reverse.0} parent=12 // loop_header
          %s11 = sphi 0, %s15
          %p12 = scmp.ge.s32.totalorder %s11, 1
          %s16 = sphi %s0, %s0
          %s17 = sphi %s2, %s2
        $region16: #{reverse.0} parent=12 // loop_header_branch
          %14 = sbr.rel (%p12) target = $region20
        $region17: #{reverse.0} parent=12 // loop_body
          %v18 = vld [vmem:[%s16] sm:$0xff]
          %19 = vst [vmem:[%s17] sm:$0xff] %v18
          %v20 = vld [vmem:[%s16 + $0x8] sm:$0xff]
          %21 = vst [vmem:[%s17 + $0x10] sm:$0xff] %v20
          %v22 = vld [vmem:[%s16 + $0x10] sm:$0xff]
          %23 = vst [vmem:[%s17 + $0x20] sm:$0xff] %v22
          %v24 = vld [vmem:[%s16 + $0x18] sm:$0xff]
          %25 = vst [vmem:[%s17 + $0x30] sm:$0xff] %v24
          %v26 = vld [vmem:[%s16 + $0x20] sm:$0xff]
          %27 = vst [vmem:[%s17 + $0x40] sm:$0xff] %v26
          %v28 = vld [vmem:[%s16 + $0x28] sm:$0xff]
          %29 = vst [vmem:[%s17 + $0x50] sm:$0xff] %v28
          %v30 = vld [vmem:[%s16 + $0x30] sm:$0xff]
          %31 = vst [vmem:[%s17 + $0x60] sm:$0xff] %v30
          %v32 = vld [vmem:[%s16 + $0x38] sm:$0xff]
          %33 = vst [vmem:[%s17 + $0x70] sm:$0xff] %v32
        $region18: #{reverse.0} parent=12 // loop_footer
          %s15 = sadd.s32 1, %s11
        $region19: #{reverse.0} parent=12 // loop_footer_branch
          %10 = sbr.rel target = $region15
        $region20: #{reverse.0} parent=12 // loop_exit
          _
      $region13: #{reverse.0} parent=4 // pred_fallthru
        _
    $region5: #{reverse.0} parent=1 // pred_fallthru
      _
    %62 = vnop
    %s63 = scalar_lea.vmem [#allocation0], 7
    %v64 = vld [vmem:[%s63] ss:$-1 sm:$0xff]
    %v65 = vrot.slane %v64, 1
    %66 = vst [vmem:[#allocation1] sm:$0xff] %v65
    %s67 = scalar_lea.vmem [#allocation0], 8
    %s68 = scalar_lea.vmem %s67, 7 [#allocation0]
    %v69 = vld [vmem:[%s68] ss:$-1 sm:$0xff]
    %v70 = vrot.slane %v69, 1
    %v71 = vlaneseq
    %v72 = vshrl.u32 %v71, 7
    %vm73 = vcmp.lt.s32.totalorder %v72, 7
    %74 = vst.msk [vmem:[#allocation1] sm:$0xff] %vm73, %v70
    %s75 = scalar_lea.vmem [#allocation1], 8
    %s76 = scalar_lea.vmem [#allocation0], 16
    %s77 = scalar_lea.vmem %s76, 7 [#allocation0]
    %v78 = vld [vmem:[%s77] ss:$-1 sm:$0xff]
    %v79 = vrot.slane %v78, 1
    %80 = vst [vmem:[%s75] sm:$0xff] %v79
    %s81 = scalar_lea.vmem %s76, 8 [#allocation0]
    %s82 = scalar_lea.vmem %s81, 7 [#allocation0]
    %v83 = vld [vmem:[%s82] ss:$-1 sm:$0xff]
    %v84 = vrot.slane %v83, 1
    %v85 = vlaneseq
    %v86 = vshrl.u32 %v85, 7
    %vm87 = vcmp.lt.s32.totalorder %v86, 7
    %88 = vst.msk [vmem:[%s75] sm:$0xff] %vm87, %v84
    %s89 = scalar_lea.vmem [#allocation1], 16
    %s90 = scalar_lea.vmem [#allocation0], 32
    %s91 = scalar_lea.vmem %s90, 7 [#allocation0]
    %v92 = vld [vmem:[%s91] ss:$-1 sm:$0xff]
    %v93 = vrot.slane %v92, 1
    %94 = vst [vmem:[%s89] sm:$0xff] %v93
    %s95 = scalar_lea.vmem %s90, 8 [#allocation0]
    %s96 = scalar_lea.vmem %s95, 7 [#allocation0]
    %v97 = vld [vmem:[%s96] ss:$-1 sm:$0xff]
    %v98 = vrot.slane %v97, 1
    %v99 = vlaneseq
    %v100 = vshrl.u32 %v99, 7
    %vm101 = vcmp.lt.s32.totalorder %v100, 7
    %102 = vst.msk [vmem:[%s89] sm:$0xff] %vm101, %v98
    %s103 = scalar_lea.vmem [#allocation1], 24
    %s104 = scalar_lea.vmem [#allocation0], 48
    %s105 = scalar_lea.vmem %s104, 7 [#allocation0]
    %v106 = vld [vmem:[%s105] ss:$-1 sm:$0xff]
    %v107 = vrot.slane %v106, 1
    %108 = vst [vmem:[%s103] sm:$0xff] %v107
    %s109 = scalar_lea.vmem %s104, 8 [#allocation0]
    %s110 = scalar_lea.vmem %s109, 7 [#allocation0]
    %v111 = vld [vmem:[%s110] ss:$-1 sm:$0xff]
    %v112 = vrot.slane %v111, 1
    %v113 = vlaneseq
    %v114 = vshrl.u32 %v113, 7
    %vm115 = vcmp.lt.s32.totalorder %v114, 7
    %116 = vst.msk [vmem:[%s103] sm:$0xff] %vm115, %v112
    %s117 = scalar_lea.vmem [#allocation1], 32
    %s118 = scalar_lea.vmem [#allocation0], 64
    %s119 = scalar_lea.vmem %s118, 7 [#allocation0]
    %v120 = vld [vmem:[%s119] ss:$-1 sm:$0xff]
    %v121 = vrot.slane %v120, 1
    %122 = vst [vmem:[%s117] sm:$0xff] %v121
    %s123 = scalar_lea.vmem %s118, 8 [#allocation0]
    %s124 = scalar_lea.vmem %s123, 7 [#allocation0]
    %v125 = vld [vmem:[%s124] ss:$-1 sm:$0xff]
    %v126 = vrot.slane %v125, 1
    %v127 = vlaneseq
    %v128 = vshrl.u32 %v127, 7
    %vm129 = vcmp.lt.s32.totalorder %v128, 7
    %130 = vst.msk [vmem:[%s117] sm:$0xff] %vm129, %v126
    %s131 = scalar_lea.vmem [#allocation1], 40
    %s132 = scalar_lea.vmem [#allocation0], 80
    %s133 = scalar_lea.vmem %s132, 7 [#allocation0]
    %v134 = vld [vmem:[%s133] ss:$-1 sm:$0xff]
    %v135 = vrot.slane %v134, 1
    %136 = vst [vmem:[%s131] sm:$0xff] %v135
    %s137 = scalar_lea.vmem %s132, 8 [#allocation0]
    %s138 = scalar_lea.vmem %s137, 7 [#allocation0]
    %v139 = vld [vmem:[%s138] ss:$-1 sm:$0xff]
    %v140 = vrot.slane %v139, 1
    %v141 = vlaneseq
    %v142 = vshrl.u32 %v141, 7
    %vm143 = vcmp.lt.s32.totalorder %v142, 7
    %144 = vst.msk [vmem:[%s131] sm:$0xff] %vm143, %v140
    %s145 = scalar_lea.vmem [#allocation1], 48
    %s146 = scalar_lea.vmem [#allocation0], 96
    %s147 = scalar_lea.vmem %s146, 7 [#allocation0]
    %v148 = vld [vmem:[%s147] ss:$-1 sm:$0xff]
    %v149 = vrot.slane %v148, 1
    %150 = vst [vmem:[%s145] sm:$0xff] %v149
    %s151 = scalar_lea.vmem %s146, 8 [#allocation0]
    %s152 = scalar_lea.vmem %s151, 7 [#allocation0]
    %v153 = vld [vmem:[%s152] ss:$-1 sm:$0xff]
    %v154 = vrot.slane %v153, 1
    %v155 = vlaneseq
    %v156 = vshrl.u32 %v155, 7
    %vm157 = vcmp.lt.s32.totalorder %v156, 7
    %158 = vst.msk [vmem:[%s145] sm:$0xff] %vm157, %v154
    %s159 = scalar_lea.vmem [#allocation1], 56
    %s160 = scalar_lea.vmem [#allocation0], 112
    %s161 = scalar_lea.vmem %s160, 7 [#allocation0]
    %v162 = vld [vmem:[%s161] ss:$-1 sm:$0xff]
    %v163 = vrot.slane %v162, 1
    %164 = vst [vmem:[%s159] sm:$0xff] %v163
    %s165 = scalar_lea.vmem %s160, 8 [#allocation0]
    %s166 = scalar_lea.vmem %s165, 7 [#allocation0]
    %v167 = vld [vmem:[%s166] ss:$-1 sm:$0xff]
    %v168 = vrot.slane %v167, 1
    %v169 = vlaneseq
    %v170 = vshrl.u32 %v169, 7
    %vm171 = vcmp.lt.s32.totalorder %v170, 7
    %172 = vst.msk [vmem:[%s159] sm:$0xff] %vm171, %v168
    // Predicated region
    $region36: #{reverse.0} parent=1 // pred_check
      _
    $region37: #{reverse.0} parent=1 // pred_check_branch
      %174 = sbr.rel (0) target = $region39
    $region38: #{reverse.0} parent=1 // pred_region
      // Predicated region
      $region40: #{reverse.0} parent=38 // pred_check
        _
      $region41: #{reverse.0} parent=38 // pred_check_branch
        %176 = sbr.rel (0) target = $region43
      $region42: #{reverse.0} parent=38 // pred_region
        // Predicated region
        $region55: #{reverse.0} parent=42 // pred_check
          _
        $region56: #{reverse.0} parent=42 // pred_check_branch
          %205 = sbr.rel (0) target = $region58
        $region57: #{reverse.0} parent=42 // pred_region
          loop: start=0, step=1, limit=1
          $region59: #{reverse.0} parent=57 // loop_pre_header
            _
          $region60: #{reverse.0} parent=57 // loop_header
            %s207 = sphi 0, %s211
            %p208 = scmp.ge.s32.totalorder %s207, 1
            %s212 = sphi [#allocation1], [#allocation1]
            %s213 = sphi %s1, %s1
          $region61: #{reverse.0} parent=57 // loop_header_branch
            %210 = sbr.rel (%p208) target = $region65
          $region62: #{reverse.0} parent=57 // loop_body
            %v214 = vld [vmem:[%s212] sm:$0xff]
            %215 = vst [vmem:[%s213] sm:$0xff] %v214
            %v216 = vld [vmem:[%s212 + $0x8] sm:$0xff]
            %217 = vst [vmem:[%s213 + $0x8] sm:$0xff] %v216
            %v218 = vld [vmem:[%s212 + $0x10] sm:$0xff]
            %219 = vst [vmem:[%s213 + $0x10] sm:$0xff] %v218
            %v220 = vld [vmem:[%s212 + $0x18] sm:$0xff]
            %221 = vst [vmem:[%s213 + $0x18] sm:$0xff] %v220
            %v222 = vld [vmem:[%s212 + $0x20] sm:$0xff]
            %223 = vst [vmem:[%s213 + $0x20] sm:$0xff] %v222
            %v224 = vld [vmem:[%s212 + $0x28] sm:$0xff]
            %225 = vst [vmem:[%s213 + $0x28] sm:$0xff] %v224
            %v226 = vld [vmem:[%s212 + $0x30] sm:$0xff]
            %227 = vst [vmem:[%s213 + $0x30] sm:$0xff] %v226
            %v228 = vld [vmem:[%s212 + $0x38] sm:$0xff]
            %229 = vst [vmem:[%s213 + $0x38] sm:$0xff] %v228
          $region63: #{reverse.0} parent=57 // loop_footer
            %s211 = sadd.s32 1, %s207
          $region64: #{reverse.0} parent=57 // loop_footer_branch
            %206 = sbr.rel target = $region60
          $region65: #{reverse.0} parent=57 // loop_exit
            _
        $region58: #{reverse.0} parent=42 // pred_fallthru
          _
        // Predicated region
        $region66: #{reverse.0} parent=42 // pred_check
          _
        $region67: #{reverse.0} parent=42 // pred_check_branch
          %231 = sbr.rel target = $region69
        $region68: #{reverse.0} parent=42 // pred_region
          _
        $region69: #{reverse.0} parent=42 // pred_fallthru
          _
      $region43: #{reverse.0} parent=38 // pred_fallthru
        _
      // Predicated region
      $region44: #{reverse.0} parent=38 // pred_check
        _
      $region45: #{reverse.0} parent=38 // pred_check_branch
        %178 = sbr.rel target = $region47
      $region46: #{reverse.0} parent=38 // pred_region
        loop: start=0, step=1, limit=1
        $region48: #{reverse.0} parent=46 // loop_pre_header
          _
        $region49: #{reverse.0} parent=46 // loop_header
          %s181 = sphi 0, %s185
          %p182 = scmp.ge.s32.totalorder %s181, 1
          %s186 = sphi [#allocation1], [#allocation1]
          %s187 = sphi %s1, %s1
        $region50: #{reverse.0} parent=46 // loop_header_branch
          %184 = sbr.rel (%p182) target = $region54
        $region51: #{reverse.0} parent=46 // loop_body
          %v188 = vld [vmem:[%s186] sm:$0xff]
          %189 = vst [vmem:[%s187] sm:$0xff] %v188
          %v190 = vld [vmem:[%s186 + $0x8] sm:$0xff]
          %191 = vst [vmem:[%s187 + $0x8] sm:$0xff] %v190
          %v192 = vld [vmem:[%s186 + $0x10] sm:$0xff]
          %193 = vst [vmem:[%s187 + $0x10] sm:$0xff] %v192
          %v194 = vld [vmem:[%s186 + $0x18] sm:$0xff]
          %195 = vst [vmem:[%s187 + $0x18] sm:$0xff] %v194
          %v196 = vld [vmem:[%s186 + $0x20] sm:$0xff]
          %197 = vst [vmem:[%s187 + $0x20] sm:$0xff] %v196
          %v198 = vld [vmem:[%s186 + $0x28] sm:$0xff]
          %199 = vst [vmem:[%s187 + $0x28] sm:$0xff] %v198
          %v200 = vld [vmem:[%s186 + $0x30] sm:$0xff]
          %201 = vst [vmem:[%s187 + $0x30] sm:$0xff] %v200
          %v202 = vld [vmem:[%s186 + $0x38] sm:$0xff]
          %203 = vst [vmem:[%s187 + $0x38] sm:$0xff] %v202
        $region52: #{reverse.0} parent=46 // loop_footer
          %s185 = sadd.s32 1, %s181
        $region53: #{reverse.0} parent=46 // loop_footer_branch
          %180 = sbr.rel target = $region49
        $region54: #{reverse.0} parent=46 // loop_exit
          _
      $region47: #{reverse.0} parent=38 // pred_fallthru
        _
    $region39: #{reverse.0} parent=1 // pred_fallthru
      _
    %232 = vnop

// kernel: spectral_conv2d_forward.3
$region0: #{spectral_conv2d_forward.3}
  #allocation0 [shape = 'u32[]', space=smem, size = 0x4, offset = 0x4, fixed_abs, tag = 'smem constant byte address 0x4 - core index']
  #allocation1 [shape = 'u32[144,128]{1,0:T(1,128)}', space=vmem, size = 0x12000, scoped, tag = 'internal scratch']
  %s0 = inlined_call_operand.vmem [shape: f32[2,4,256], index: 0, kind: input, shape index: {}]
  %s1 = inlined_call_operand.vmem [shape: f32[2,4,256], index: 1, kind: input, shape index: {}]
  %s2 = inlined_call_operand.vmem [shape: f32[4,4], index: 2, kind: input, shape index: {}]
  %s3 = inlined_call_operand.vmem [shape: f32[4,1], index: 3, kind: input, shape index: {}]
  %s4 = inlined_call_operand.vmem [shape: f32[2,4,256], index: 4, kind: output, shape index: {}]
  %s5 = sld [smem:[#allocation0]]
  $region49: #{spectral_conv2d_forward.3} parent=0
    _
  %s7 = ssub.s32 1, %s5
  %s8 = scalar_select 0, %s7, %s5
  loop: start=0, step=1, limit=4
  $region2: #{spectral_conv2d_forward.3} parent=0 // loop_pre_header
    _
  $region3: #{spectral_conv2d_forward.3} parent=0 // loop_header
    %s10 = sphi 0, %s14
    %p11 = scmp.ge.s32.totalorder %s10, 4
    %s17 = sphi 0, %s29
    %s18 = sphi 0, %s25
    %s19 = sphi 0, %s17
    %s20 = sphi 0, %s18
    %s21 = sphi 0, %s19
    %s22 = sphi 0, %s20
    %s34 = sphi 0, %s36
    %s37 = sphi 0, %s34
    %s38 = sphi 0, %s37
    %s54 = sphi 0, %s38
    %s62 = sphi 0, %s64
    %s65 = sphi 0, %s62
    %s66 = sphi 0, %s65
    %s82 = sphi 0, %s66
    %s86 = sphi 0, %s86
    %s88 = sphi 0, %s86
    %s89 = sphi 0, %s88
    %s103 = sphi 0, %s89
    %s107 = sphi 0, %s107
    %s109 = sphi 0, %s107
    %s110 = sphi 0, %s109
    %s124 = sphi 0, %s110
    %s132 = sphi 0, %s134
    %s135 = sphi 0, %s132
    %s136 = sphi 0, %s135
    %s152 = sphi 0, %s136
  $region4: #{spectral_conv2d_forward.3} parent=0 // loop_header_branch
    %13 = sbr.rel (%p11) target = $region8
  $region5: #{spectral_conv2d_forward.3} parent=0 // loop_body
    %s15 = ssub.s32 %s10, 1
    %s16 = ssub.s32 %s10, 2
    %s23 = sadd.s32 1, %s18
    %p24 = scmp.ge.s32.totalorder %s23, 1
    %s25 = scalar_select %p24, 0, %s23
    %s26 = sadd.s32 1, %s17
    %s27 = scalar_select %p24, %s26, %s17
    %p28 = scmp.ge.s32.totalorder %s27, 2
    %s29 = scalar_select %p28, 0, %s27
    %s30 = ssub.s32 %s17, %s29
    %s31 = ssub.s32 %s18, %s25
    %s32 = sor.u32 %s30, %s31
    %p33 = scmp.eq.s32.totalorder %s32, 0
    %s35 = sadd.s32 %s34, 1
    %s36 = scalar_select %p33, %s34, %s35
    %p39 = pneg %p33
    %p40 = scmp.eq.s32.totalorder %s10, 1
    %p41 = por %p39, %p40
    %p42 = scmp.ne.s32.totalorder %s34, %s37
    %p43 = scmp.eq.s32.totalorder %s10, 0
    %p44 = por %p42, %p43
    %p45 = scmp.ne.s32.totalorder %s34, %s37
    %p46 = scmp.eq.s32.totalorder %s15, 1
    %p47 = por %p45, %p46
    %p48 = scmp.ne.s32.totalorder %s37, %s38
    %p49 = scmp.eq.s32.totalorder %s15, 0
    %p50 = por %p48, %p49
    %p51 = scmp.ne.s32.totalorder %s37, %s38
    %p52 = scmp.eq.s32.totalorder %s16, 1
    %p53 = por %p51, %p52
    %p55 = scmp.ne.s32.totalorder %s38, %s54
    %p56 = scmp.eq.s32.totalorder %s16, 0
    %p57 = por %p55, %p56
    %s58 = ssub.s32 %s17, %s29
    %s59 = ssub.s32 %s18, %s25
    %s60 = sor.u32 %s58, %s59
    %p61 = scmp.eq.s32.totalorder %s60, 0
    %s63 = sadd.s32 %s62, 1
    %s64 = scalar_select %p61, %s62, %s63
    %p67 = pneg %p61
    %p68 = scmp.eq.s32.totalorder %s10, 1
    %p69 = por %p67, %p68
    %p70 = scmp.ne.s32.totalorder %s62, %s65
    %p71 = scmp.eq.s32.totalorder %s10, 0
    %p72 = por %p70, %p71
    %p73 = scmp.ne.s32.totalorder %s62, %s65
    %p74 = scmp.eq.s32.totalorder %s15, 1
    %p75 = por %p73, %p74
    %p76 = scmp.ne.s32.totalorder %s65, %s66
    %p77 = scmp.eq.s32.totalorder %s15, 0
    %p78 = por %p76, %p77
    %p79 = scmp.ne.s32.totalorder %s65, %s66
    %p80 = scmp.eq.s32.totalorder %s16, 1
    %p81 = por %p79, %p80
    %p83 = scmp.ne.s32.totalorder %s66, %s82
    %p84 = scmp.eq.s32.totalorder %s16, 0
    %p85 = por %p83, %p84
    %s87 = sadd.s32 %s86, 1
    %p90 = scmp.eq.s32.totalorder %s10, 1
    %p91 = scmp.ne.s32.totalorder %s86, %s88
    %p92 = scmp.eq.s32.totalorder %s10, 0
    %p93 = por %p91, %p92
    %p94 = scmp.ne.s32.totalorder %s86, %s88
    %p95 = scmp.eq.s32.totalorder %s15, 1
    %p96 = por %p94, %p95
    %p97 = scmp.ne.s32.totalorder %s88, %s89
    %p98 = scmp.eq.s32.totalorder %s15, 0
    %p99 = por %p97, %p98
    %p100 = scmp.ne.s32.totalorder %s88, %s89
    %p101 = scmp.eq.s32.totalorder %s16, 1
    %p102 = por %p100, %p101
    %p104 = scmp.ne.s32.totalorder %s89, %s103
    %p105 = scmp.eq.s32.totalorder %s16, 0
    %p106 = por %p104, %p105
    %s108 = sadd.s32 %s107, 1
    %p111 = scmp.eq.s32.totalorder %s10, 1
    %p112 = scmp.ne.s32.totalorder %s107, %s109
    %p113 = scmp.eq.s32.totalorder %s10, 0
    %p114 = por %p112, %p113
    %p115 = scmp.ne.s32.totalorder %s107, %s109
    %p116 = scmp.eq.s32.totalorder %s15, 1
    %p117 = por %p115, %p116
    %p118 = scmp.ne.s32.totalorder %s109, %s110
    %p119 = scmp.eq.s32.totalorder %s15, 0
    %p120 = por %p118, %p119
    %p121 = scmp.ne.s32.totalorder %s109, %s110
    %p122 = scmp.eq.s32.totalorder %s16, 1
    %p123 = por %p121, %p122
    %p125 = scmp.ne.s32.totalorder %s110, %s124
    %p126 = scmp.eq.s32.totalorder %s16, 0
    %p127 = por %p125, %p126
    %s128 = ssub.s32 %s17, %s29
    %s129 = ssub.s32 %s18, %s25
    %s130 = sor.u32 %s128, %s129
    %p131 = scmp.eq.s32.totalorder %s130, 0
    %s133 = sadd.s32 %s132, 1
    %s134 = scalar_select %p131, %s132, %s133
    %p137 = pneg %p131
    %p138 = scmp.eq.s32.totalorder %s10, 1
    %p139 = por %p137, %p138
    %p140 = scmp.ne.s32.totalorder %s132, %s135
    %p141 = scmp.eq.s32.totalorder %s10, 0
    %p142 = por %p140, %p141
    %p143 = scmp.ne.s32.totalorder %s132, %s135
    %p144 = scmp.eq.s32.totalorder %s15, 1
    %p145 = por %p143, %p144
    %p146 = scmp.ne.s32.totalorder %s135, %s136
    %p147 = scmp.eq.s32.totalorder %s15, 0
    %p148 = por %p146, %p147
    %p149 = scmp.ne.s32.totalorder %s135, %s136
    %p150 = scmp.eq.s32.totalorder %s16, 1
    %p151 = por %p149, %p150
    %p153 = scmp.ne.s32.totalorder %s136, %s152
    %p154 = scmp.eq.s32.totalorder %s16, 0
    %p155 = por %p153, %p154
    %p156 = scmp.le.s32.totalorder 1, %s10
    %p157 = scmp.lt.s32.totalorder %s10, 3
    %p158 = pnand %p156, %p157
    %p159 = pneg %p158
    // Predicated region
    $region9: #{spectral_conv2d_forward.3} parent=5 // pred_check
      _
    $region10: #{spectral_conv2d_forward.3} parent=5 // pred_check_branch
      %161 = sbr.rel (%p158) target = $region12
    $region11: #{spectral_conv2d_forward.3} parent=5 // pred_region
      %s162 = ssub.s32 %s10, 1
      // Predicated region
      $region13: #{spectral_conv2d_forward.3} parent=11 // pred_check
        %p163 = pneg %p99
      $region14: #{spectral_conv2d_forward.3} parent=11 // pred_check_branch
        %165 = sbr.rel (%p163) target = $region16
      $region15: #{spectral_conv2d_forward.3} parent=11 // pred_region
        _
      $region16: #{spectral_conv2d_forward.3} parent=11 // pred_fallthru
        _
      // Predicated region
      $region17: #{spectral_conv2d_forward.3} parent=11 // pred_check
        %p166 = pneg %p120
      $region18: #{spectral_conv2d_forward.3} parent=11 // pred_check_branch
        %168 = sbr.rel (%p166) target = $region20
      $region19: #{spectral_conv2d_forward.3} parent=11 // pred_region
        _
      $region20: #{spectral_conv2d_forward.3} parent=11 // pred_fallthru
        _
    $region12: #{spectral_conv2d_forward.3} parent=5 // pred_fallthru
      _
    %p169 = scmp.lt.s32.totalorder %s10, 2
    // Predicated region
    $region21: #{spectral_conv2d_forward.3} parent=5 // pred_check
      %p170 = pneg %p169
    $region22: #{spectral_conv2d_forward.3} parent=5 // pred_check_branch
      %172 = sbr.rel (%p170) target = $region24
    $region23: #{spectral_conv2d_forward.3} parent=5 // pred_region
      // Predicated region
      $region25: #{spectral_conv2d_forward.3} parent=23 // pred_check
        %p173 = pneg %p44
      $region26: #{spectral_conv2d_forward.3} parent=23 // pred_check_branch
        %175 = sbr.rel (%p173) target = $region28
      $region27: #{spectral_conv2d_forward.3} parent=23 // pred_region
        %s176 = smul.u32 2, %s18
        %p177 = scmp.lt.s32.totalorder %s17, 1
        %s178 = scalar_select %p177, %s17, 1
        %p179 = scmp.lt.s32.totalorder %s176, 1
        %s180 = scalar_select %p179, %s176, 1
        %s181 = smul.addr %s178, 2
        %s182 = sadd.s32 %s180, %s181
        %s183 = smul.addr %s182, 4
        %s184 = scalar_lea.vmem %s0, %s183
        %s185 = smul.u32 2, %s18
      $region28: #{spectral_conv2d_forward.3} parent=23 // pred_fallthru
        _
      // Predicated region
      $region29: #{spectral_conv2d_forward.3} parent=23 // pred_check
        %p186 = pneg %p72
      $region30: #{spectral_conv2d_forward.3} parent=23 // pred_check_branch
        %188 = sbr.rel (%p186) target = $region32
      $region31: #{spectral_conv2d_forward.3} parent=23 // pred_region
        %s189 = smul.u32 2, %s18
        %p190 = scmp.lt.s32.totalorder %s17, 1
        %s191 = scalar_select %p190, %s17, 1
        %p192 = scmp.lt.s32.totalorder %s189, 1
        %s193 = scalar_select %p192, %s189, 1
        %s194 = smul.addr %s191, 2
        %s195 = sadd.s32 %s193, %s194
        %s196 = smul.addr %s195, 4
        %s197 = scalar_lea.vmem %s1, %s196
        %s198 = smul.u32 2, %s18
      $region32: #{spectral_conv2d_forward.3} parent=23 // pred_fallthru
        _
    $region24: #{spectral_conv2d_forward.3} parent=5 // pred_fallthru
      _
    %p199 = scmp.le.s32.totalorder 1, %s10
    %p200 = scmp.lt.s32.totalorder %s10, 3
    %p201 = pnand %p199, %p200
    %p202 = pneg %p201
    // Predicated region
    $region33: #{spectral_conv2d_forward.3} parent=5 // pred_check
      _
    $region34: #{spectral_conv2d_forward.3} parent=5 // pred_check_branch
      %204 = sbr.rel (%p201) target = $region36
    $region35: #{spectral_conv2d_forward.3} parent=5 // pred_region
      %s205 = ssub.s32 %s10, 1
      %s206 = smul.u32 2, %s20
      %p207 = scmp.lt.s32.totalorder %s19, 1
      %s208 = scalar_select %p207, %s19, 1
      %p209 = scmp.lt.s32.totalorder %s206, 1
      %s210 = scalar_select %p209, %s206, 1
      %s211 = smul.addr %s208, 2
      %s212 = sadd.s32 %s210, %s211
      %s213 = smul.addr %s212, 4
      %s214 = scalar_lea.vmem %s0, %s213
      %p215 = pneg %p50
      %p216 = pneg %p47
      %s217 = smul.u32 2, %s20
      %p218 = scmp.lt.s32.totalorder %s19, 1
      %s219 = scalar_select %p218, %s19, 1
      %p220 = scmp.lt.s32.totalorder %s217, 1
      %s221 = scalar_select %p220, %s217, 1
      %s222 = smul.addr %s219, 2
      %s223 = sadd.s32 %s221, %s222
      %s224 = smul.addr %s223, 4
      %s225 = scalar_lea.vmem %s1, %s224
      %p226 = pneg %p78
      %p227 = pneg %p75
      %p228 = pneg %p99
      %p229 = pneg %p96
      %p230 = pneg %p120
      %p231 = pneg %p117
      %p232 = pneg %p148
      %p233 = pneg %p145
      %s234 = smul.u32 2, %s20
      %p235 = scmp.lt.s32.totalorder %s19, 1
      %s236 = scalar_select %p235, %s19, 1
      %p237 = scmp.lt.s32.totalorder %s234, 1
      %s238 = scalar_select %p237, %s234, 1
      %s239 = smul.addr %s236, 2
      %s240 = sadd.s32 %s238, %s239
      %s241 = smul.addr %s240, 4
      %s242 = scalar_lea.vmem %s4, %s241
      %s243 = smul.u32 2, %s20
      %p244 = scmp.lt.s32.totalorder %s19, 1
      %s245 = scalar_select %p244, %s19, 1
      %p246 = scmp.lt.s32.totalorder %s243, 1
      %s247 = scalar_select %p246, %s243, 1
      %s248 = smul.addr %s245, 2
      %s249 = sadd.s32 %s247, %s248
      %s250 = smul.addr %s249, 4
      %s251 = scalar_lea.vmem %s0, %s250
      %s252 = smul.u32 2, %s20
      %s253 = smul.u32 2, %s20
      %p254 = scmp.lt.s32.totalorder %s19, 1
      %s255 = scalar_select %p254, %s19, 1
      %p256 = scmp.lt.s32.totalorder %s253, 1
      %s257 = scalar_select %p256, %s253, 1
      %s258 = smul.addr %s255, 2
      %s259 = sadd.s32 %s257, %s258
      %s260 = smul.addr %s259, 4
      %s261 = scalar_lea.vmem %s1, %s260
      %s262 = smul.u32 2, %s20
      %s263 = smul.u32 2, %s20
      %p264 = scmp.lt.s32.totalorder %s19, 1
      %s265 = scalar_select %p264, %s19, 1
      %p266 = scmp.lt.s32.totalorder %s263, 1
      %s267 = scalar_select %p266, %s263, 1
      %s268 = smul.addr %s265, 2
      %s269 = sadd.s32 %s267, %s268
      %s270 = smul.addr %s269, 4
      %s271 = scalar_lea.vmem %s4, %s270
      %s272 = smul.u32 2, %s20
      %v273 = vld [vmem:[%s2] sm:$0xf]
      %v274 = vld [vmem:[%s251] sm:$0xff]
      %v275 = vld [vmem:[%s3] sm:$0xf]
      %277 = vset.pattern.permute.xlu0 0
      %278 = vperm.xlu0 %277, %v275
      %v279 = vpop.permute.xlu0 %278
      %v282 = vcombine.high %v274, %v274
      %vm283 = vcmask 31744
      %v285 = vsel %vm283, %v273, 0
      %vm287 = vcmask 1043456
      %v288 = vsel %vm287, %v274, 0
      %v290 = vsel %vm287, %v282, 0
      %292 = vmatprep.subr.mxu0 %v290
      %293 = vmatpush1.msra.mxu0 %v288
      %294 = vmatprep.subr.mxu0 0.0
      %295 = vmatpush1.msra.mxu0 0.0
      %296 = vmatprep.subr.mxu0 0.0
      %297 = vmatpush1.msra.mxu0 0.0
      %298 = vmatprep.subr.mxu0 0.0
      %299 = vmatpush1.msra.mxu0 0.0
      %300 = vmatprep.subr.mxu0 0.0
      %301 = vmatpush1.msra.mxu0 0.0
      %302 = vmatprep.subr.mxu0 0.0
      %303 = vmatpush1.msra.mxu0 0.0
      %304 = vmatprep.subr.mxu0 0.0
      %305 = vmatpush1.msra.mxu0 0.0
      %306 = vmatprep.subr.mxu0 0.0
      %307 = vmatpush1.msra.mxu0 0.0
      %308 = vmatprep.subr.mxu0 0.0
      %309 = vmatpush1.msra.mxu0 0.0
      %310 = vmatprep.subr.mxu0 0.0
      %311 = vmatpush1.msra.mxu0 0.0
      %312 = vmatprep.subr.mxu0 0.0
      %313 = vmatpush1.msra.mxu0 0.0
      %314 = vmatprep.subr.mxu0 0.0
      %315 = vmatpush1.msra.mxu0 0.0
      %316 = vmatprep.subr.mxu0 0.0
      %317 = vmatpush1.msra.mxu0 0.0
      %318 = vmatprep.subr.mxu0 0.0
      %319 = vmatpush1.msra.mxu0 0.0
      %320 = vmatprep.subr.mxu0 0.0
      %321 = vmatpush1.msra.mxu0 0.0
      %322 = vmatprep.subr.mxu0 0.0
      %323 = vmatpush1.msra.mxu0 0.0
      %324 = vmatprep.subr.mxu0 0.0
      %325 = vmatpush1.msra.mxu0 0.0
      %326 = vmatprep.subr.mxu0 0.0
      %327 = vmatpush1.msra.mxu0 0.0
      %328 = vmatprep.subr.mxu0 0.0
      %329 = vmatpush1.msra.mxu0 0.0
      %330 = vmatprep.subr.mxu0 0.0
      %331 = vmatpush1.msra.mxu0 0.0
      %332 = vmatprep.subr.mxu0 0.0
      %333 = vmatpush1.msra.mxu0 0.0
      %334 = vmatprep.subr.mxu0 0.0
      %335 = vmatpush1.msra.mxu0 0.0
      %336 = vmatprep.subr.mxu0 0.0
      %337 = vmatpush1.msra.mxu0 0.0
      %338 = vmatprep.subr.mxu0 0.0
      %339 = vmatpush1.msra.mxu0 0.0
      %340 = vmatprep.subr.mxu0 0.0
      %341 = vmatpush1.msra.mxu0 0.0
      %342 = vmatprep.subr.mxu0 0.0
      %343 = vmatpush1.msra.mxu0 0.0
      %344 = vmatprep.subr.mxu0 0.0
      %345 = vmatpush1.msra.mxu0 0.0
      %346 = vmatprep.subr.mxu0 0.0
      %347 = vmatpush1.msra.mxu0 0.0
      %348 = vmatprep.subr.mxu0 0.0
      %349 = vmatpush1.msra.mxu0 0.0
      %350 = vmatprep.subr.mxu0 0.0
      %351 = vmatpush1.msra.mxu0 0.0
      %352 = vmatprep.subr.mxu0 0.0
      %353 = vmatpush1.msra.mxu0 0.0
      %354 = vmatprep.subr.mxu0 0.0
      %355 = vmatpush1.msra.mxu0 0.0
      %356 = vmatprep.mubr.f32.mxu0 0.0
      %357 = vmatmul.mubr.f32.gmra.mrb[0].mxu0 %v285
      %v358 = vpop.f32.mrb[0].mxu0
      %v359 = vadd.f32 %v279, %v358
      %v360 = vpop.f32.mrb[0].mxu0
      %v361 = vadd.f32 %v279, %v360
      %362 = vdwg.mxu0
      %v363 = vld [vmem:[%s261] sm:$0xff]
      %v365 = vcombine.high %v363, %v363
      %v367 = vadd.f32 %v359, %v363
      %v368 = vadd.f32 %v361, %v365
      %v369 = vmax.f32 %v367, 0.0
      %v370 = vmax.f32 %v368, 0.0
      %v373 = vcombine.low %v369, %v370
      %375 = vst [vmem:[%s271] sm:$0xff] %v373
      %s376 = smul.u32 2, %s20
      %p377 = scmp.lt.s32.totalorder %s19, 1
      %s378 = scalar_select %p377, %s19, 1
      %p379 = scmp.lt.s32.totalorder %s376, 1
      %s380 = scalar_select %p379, %s376, 1
      %s381 = smul.addr %s378, 2
      %s382 = sadd.s32 %s380, %s381
      %s383 = smul.addr %s382, 4
      %s384 = scalar_lea.vmem %s4, %s383
      // Predicated region
      $region37: #{spectral_conv2d_forward.3} parent=35 // pred_check
        %p385 = pneg %p145
      $region38: #{spectral_conv2d_forward.3} parent=35 // pred_check_branch
        %387 = sbr.rel (%p385) target = $region40
      $region39: #{spectral_conv2d_forward.3} parent=35 // pred_region
        %s388 = smul.u32 2, %s20
      $region40: #{spectral_conv2d_forward.3} parent=35 // pred_fallthru
        _
    $region36: #{spectral_conv2d_forward.3} parent=5 // pred_fallthru
      _
    %p389 = scmp.le.s32.totalorder 2, %s10
    // Predicated region
    $region41: #{spectral_conv2d_forward.3} parent=5 // pred_check
      %p390 = pneg %p389
    $region42: #{spectral_conv2d_forward.3} parent=5 // pred_check_branch
      %392 = sbr.rel (%p390) target = $region44
    $region43: #{spectral_conv2d_forward.3} parent=5 // pred_region
      %s393 = ssub.s32 %s10, 2
      // Predicated region
      $region45: #{spectral_conv2d_forward.3} parent=43 // pred_check
        %p394 = pneg %p151
      $region46: #{spectral_conv2d_forward.3} parent=43 // pred_check_branch
        %396 = sbr.rel (%p394) target = $region48
      $region47: #{spectral_conv2d_forward.3} parent=43 // pred_region
        %s397 = smul.u32 2, %s22
        %p398 = scmp.lt.s32.totalorder %s21, 1
        %s399 = scalar_select %p398, %s21, 1
        %p400 = scmp.lt.s32.totalorder %s397, 1
        %s401 = scalar_select %p400, %s397, 1
        %s402 = smul.addr %s399, 2
        %s403 = sadd.s32 %s401, %s402
        %s404 = smul.addr %s403, 4
        %s405 = scalar_lea.vmem %s4, %s404
      $region48: #{spectral_conv2d_forward.3} parent=43 // pred_fallthru
        _
    $region44: #{spectral_conv2d_forward.3} parent=5 // pred_fallthru
      _
  $region6: #{spectral_conv2d_forward.3} parent=0 // loop_footer
    %s14 = sadd.s32 1, %s10
  $region7: #{spectral_conv2d_forward.3} parent=0 // loop_footer_branch
    %9 = sbr.rel target = $region3
  $region8: #{spectral_conv2d_forward.3} parent=0 // loop_exit
    _

</llo_original>
